<compile_context>
chip_gen: v7x
topology: tpu7x:2x2x1
jax: 0.10.0
libtpu: 0.0.40
codegen_flags: <defaults>
</compile_context>

<pallas_src>
import functools

import numpy as np
import jax
import jax.numpy as jnp
from jax.experimental import pallas as pl
from jax.experimental.pallas import tpu as pltpu


def _fused_kernel(x_ref, w1_ref, b1_ref, w2_ref, b2_ref, mask_ref, *rest,
                  img_w, cout):
    """Fused conv1+bn1+relu -> conv2+bn2 -> (+residual) -> relu, one image.

    x_ref:    (1, Cin, Ppad)   channel-major, lane-dense flattened image
    w1_ref:   (9, Cout, Cin)   per-tap conv1 weight, BN1 folded
    b1_ref:   (Cout, 1)        conv1 bias, BN1 folded
    w2_ref:   (9, Cout, Cout)  per-tap conv2 weight, BN2 folded
    b2_ref:   (Cout, 1)        conv2 bias, BN2 folded (+ skip bias if present)
    mask_ref: (9, 1, Ppad)     0/1 boundary masks per tap (conv zero padding)
    rest:     (ws_ref, o_ref) if a 1x1 skip conv exists, else (o_ref,)
              ws_ref: (Cout, Cin);  o_ref: (1, Cout, Ppad)
    """
    if len(rest) == 2:
        ws_ref, o_ref = rest
    else:
        ws_ref = None
        o_ref, = rest

    hw_pad = x_ref.shape[-1]
    x = x_ref[0]                                   # (Cin, Ppad) f32, in VMEM
    masks = [mask_ref[t] for t in range(9)]        # (1, Ppad) each; reused

    def conv3x3(inp, wt_ref, bias_ref):
        # inp: (C, Ppad) -> f32 (Cout, Ppad) = bias + sum_t W_t @ tap_t(inp).
        acc = jnp.broadcast_to(bias_ref[...], (cout, hw_pad)).astype(jnp.float32)
        for kh in range(3):
            for kw in range(3):
                t = kh * 3 + kw
                d = (kh - 1) * img_w + (kw - 1)    # flattened tap offset
                src = inp if d == 0 else pltpu.roll(
                    inp, shift=(-d) % hw_pad, axis=1)
                src = src * masks[t]               # zero out-of-image taps
                acc = acc + jnp.dot(wt_ref[t], src,
                                    preferred_element_type=jnp.float32)
        return acc

    y1 = jnp.maximum(conv3x3(x, w1_ref, b1_ref), 0.0)   # conv1+bn1+relu (VMEM)
    out = conv3x3(y1, w2_ref, b2_ref)                   # conv2+bn2 (+skip bias)
    # Dropout2d is identity in eval mode.
    if ws_ref is not None:                               # 1x1 skip conv
        out = out + jnp.dot(ws_ref[...], x, preferred_element_type=jnp.float32)
    else:                                                # identity residual
        out = out + x
    o_ref[0] = jnp.maximum(out, 0.0).astype(o_ref.dtype)


def _tap_masks(h, w, hw_pad):
    """0/1 masks (9, 1, Ppad) marking in-bounds source pixels per 3x3 tap."""
    rows = np.arange(h * w) // w
    cols = np.arange(h * w) % w
    masks = np.zeros((9, 1, hw_pad), np.float32)
    for kh in range(3):
        for kw in range(3):
            valid = ((rows + kh - 1 >= 0) & (rows + kh - 1 < h) &
                     (cols + kw - 1 >= 0) & (cols + kw - 1 < w))
            masks[kh * 3 + kw, 0, :h * w] = valid
    return jnp.asarray(masks)


def _fold_bn(w4d, b, gamma, beta, mean, var, eps):
    """Fold eval-mode BatchNorm into a (Cout,Cin,3,3) weight + (Cout,) bias."""
    s = gamma / jnp.sqrt(var + eps)
    return w4d * s[:, None, None, None], s * (b - mean) + beta


def residual_block_complex(x, params, eps=1e-5):
    """Forward pass of ResidualBlockComplex (inference semantics).

    x: (N, Cin, H, W) float32; params: dict of conv / BN / skip parameters.
    Returns (N, Cout, H, W) float32.
    """
    n, cin, h, w = x.shape
    cout = params['w1'].shape[0]
    hw = h * w
    hw_pad = ((hw + 127) // 128) * 128            # lane-dense blocks
    has_skip = params.get('wskip') is not None

    # Fold BN into conv weights; reorder weights to per-tap (9, Cout, C).
    w1f, b1f = _fold_bn(params['w1'], params['b1'], params['g1'],
                        params['be1'], params['m1'], params['v1'], eps)
    w2f, b2f = _fold_bn(params['w2'], params['b2'], params['g2'],
                        params['be2'], params['m2'], params['v2'], eps)
    w1t = w1f.transpose(2, 3, 0, 1).reshape(9, cout, cin)
    w2t = w2f.transpose(2, 3, 0, 1).reshape(9, cout, cout)
    if has_skip:
        b2f = b2f + params['bskip']               # fold skip bias into stage 2
    b1t = b1f.reshape(cout, 1)
    b2t = b2f.reshape(cout, 1)
    masks = _tap_masks(h, w, hw_pad)

    xf = x.reshape(n, cin, hw)
    if hw_pad != hw:
        xf = jnp.pad(xf, ((0, 0), (0, 0), (0, hw_pad - hw)))

    const3 = lambda i: (0, 0, 0)
    const2 = lambda i: (0, 0)
    in_specs = [
        pl.BlockSpec((1, cin, hw_pad), lambda i: (i, 0, 0)),
        pl.BlockSpec((9, cout, cin), const3),
        pl.BlockSpec((cout, 1), const2),
        pl.BlockSpec((9, cout, cout), const3),
        pl.BlockSpec((cout, 1), const2),
        pl.BlockSpec((9, 1, hw_pad), const3),
    ]
    args = [xf, w1t, b1t, w2t, b2t, masks]
    if has_skip:
        in_specs.append(pl.BlockSpec((cout, cin), const2))
        args.append(params['wskip'].reshape(cout, cin))

    kernel = functools.partial(_fused_kernel, img_w=w, cout=cout)
    out = pl.pallas_call(
        kernel,
        out_shape=jax.ShapeDtypeStruct((n, cout, hw_pad), jnp.float32),
        grid=(n,),
        in_specs=in_specs,
        out_specs=pl.BlockSpec((1, cout, hw_pad), lambda i: (i, 0, 0)),
        compiler_params=pltpu.CompilerParams(
            dimension_semantics=("parallel",)),
    )(*args)
    return out[:, :, :hw].reshape(n, cout, h, w)


def _ref_forward(x, params, eps=1e-5):
    """Pure-JAX reference matching the PyTorch module in eval mode."""
    def conv(z, wgt, b, pad):
        y = jax.lax.conv_general_dilated(
            z, wgt, (1, 1), ((pad, pad), (pad, pad)),
            dimension_numbers=('NCHW', 'OIHW', 'NCHW'))
        return y + b[None, :, None, None]

    def bn(z, g, be, m, v):
        return (g[None, :, None, None] * (z - m[None, :, None, None])
                / jnp.sqrt(v[None, :, None, None] + eps)
                + be[None, :, None, None])

    out = conv(x, params['w1'], params['b1'], 1)
    out = jnp.maximum(bn(out, params['g1'], params['be1'],
                         params['m1'], params['v1']), 0.0)
    out = conv(out, params['w2'], params['b2'], 1)
    out = bn(out, params['g2'], params['be2'], params['m2'], params['v2'])
    # Dropout2d: identity in eval mode.
    if params.get('wskip') is not None:
        res = conv(x, params['wskip'], params['bskip'], 0)
    else:
        res = x
    return jnp.maximum(out + res, 0.0)


if __name__ == "__main__":
    batch, cin, cout, hdim, wdim = 2, 4, 8, 16, 16

    key = jax.random.PRNGKey(0)
    ks = jax.random.split(key, 15)
    x = jax.random.normal(ks[0], (batch, cin, hdim, wdim), jnp.float32)
    params = {
        'w1': 0.1 * jax.random.normal(ks[1], (cout, cin, 3, 3), jnp.float32),
        'b1': 0.1 * jax.random.normal(ks[2], (cout,), jnp.float32),
        'g1': 1.0 + 0.1 * jax.random.normal(ks[3], (cout,), jnp.float32),
        'be1': 0.1 * jax.random.normal(ks[4], (cout,), jnp.float32),
        'm1': 0.1 * jax.random.normal(ks[5], (cout,), jnp.float32),
        'v1': jax.random.uniform(ks[6], (cout,), jnp.float32, 0.5, 1.5),
        'w2': 0.1 * jax.random.normal(ks[7], (cout, cout, 3, 3), jnp.float32),
        'b2': 0.1 * jax.random.normal(ks[8], (cout,), jnp.float32),
        'g2': 1.0 + 0.1 * jax.random.normal(ks[9], (cout,), jnp.float32),
        'be2': 0.1 * jax.random.normal(ks[10], (cout,), jnp.float32),
        'm2': 0.1 * jax.random.normal(ks[11], (cout,), jnp.float32),
        'v2': jax.random.uniform(ks[12], (cout,), jnp.float32, 0.5, 1.5),
        # in_channels != out_channels -> skip 1x1 conv is present
        'wskip': 0.1 * jax.random.normal(ks[13], (cout, cin, 1, 1), jnp.float32),
        'bskip': 0.1 * jax.random.normal(ks[14], (cout,), jnp.float32),
    }

    out = residual_block_complex(x, params)
    out = jax.block_until_ready(out)

    ref = _ref_forward(x, params)
    assert out.shape == (batch, cout, hdim, wdim), out.shape
    assert jnp.allclose(out, ref, atol=1e-4, rtol=1e-4), \
        float(jnp.max(jnp.abs(out - ref)))
    print("KERNEL_OK")
</pallas_src>

<mosaic_0001>
module attributes {stable_mosaic.version = 11 : i64} {
  func.func @_fused_kernel(%arg0: i32, %arg1: memref<1x4x256xf32, #tpu.memory_space<vmem>>, %arg2: memref<9x8x4xf32, #tpu.memory_space<vmem>>, %arg3: memref<8x1xf32, #tpu.memory_space<vmem>>, %arg4: memref<9x8x8xf32, #tpu.memory_space<vmem>>, %arg5: memref<8x1xf32, #tpu.memory_space<vmem>>, %arg6: memref<9x1x256xf32, #tpu.memory_space<vmem>>, %arg7: memref<8x4xf32, #tpu.memory_space<vmem>>, %arg8: memref<1x8x256xf32, #tpu.memory_space<vmem>>) attributes {dimension_semantics = [#tpu.dimension_semantics<parallel>], iteration_bounds = array<i64: 2>, scalar_prefetch = 0 : i64, scratch_operands = 0 : i64, tpu.core_type = #tpu.core_type<tc>, window_params = [{transform_indices = @transform_0, window_bounds = array<i64: 1, 4, 256>}, {pipeline_mode = #tpu.pipeline_mode<synchronous>, transform_indices = @transform_1, window_bounds = array<i64: 9, 8, 4>}, {pipeline_mode = #tpu.pipeline_mode<synchronous>, transform_indices = @transform_2, window_bounds = array<i64: 8, 1>}, {pipeline_mode = #tpu.pipeline_mode<synchronous>, transform_indices = @transform_3, window_bounds = array<i64: 9, 8, 8>}, {pipeline_mode = #tpu.pipeline_mode<synchronous>, transform_indices = @transform_4, window_bounds = array<i64: 8, 1>}, {pipeline_mode = #tpu.pipeline_mode<synchronous>, transform_indices = @transform_5, window_bounds = array<i64: 9, 1, 256>}, {pipeline_mode = #tpu.pipeline_mode<synchronous>, transform_indices = @transform_6, window_bounds = array<i64: 8, 4>}, {transform_indices = @transform_7, window_bounds = array<i64: 1, 8, 256>}]} {
    %c0 = arith.constant 0 : index
    %c0_0 = arith.constant 0 : index
    %c0_1 = arith.constant 0 : index
    %0 = vector.load %arg1[%c0, %c0_0, %c0_1] : memref<1x4x256xf32, #tpu.memory_space<vmem>>, vector<1x4x256xf32>
    %1 = vector.shape_cast %0 : vector<1x4x256xf32> to vector<4x256xf32>
    %c0_2 = arith.constant 0 : index
    %c0_3 = arith.constant 0 : index
    %c0_4 = arith.constant 0 : index
    %2 = vector.load %arg6[%c0_2, %c0_3, %c0_4] : memref<9x1x256xf32, #tpu.memory_space<vmem>>, vector<1x1x256xf32>
    %3 = vector.shape_cast %2 : vector<1x1x256xf32> to vector<1x256xf32>
    %c1 = arith.constant 1 : index
    %c0_5 = arith.constant 0 : index
    %c0_6 = arith.constant 0 : index
    %4 = vector.load %arg6[%c1, %c0_5, %c0_6] : memref<9x1x256xf32, #tpu.memory_space<vmem>>, vector<1x1x256xf32>
    %5 = vector.shape_cast %4 : vector<1x1x256xf32> to vector<1x256xf32>
    %c2 = arith.constant 2 : index
    %c0_7 = arith.constant 0 : index
    %c0_8 = arith.constant 0 : index
    %6 = vector.load %arg6[%c2, %c0_7, %c0_8] : memref<9x1x256xf32, #tpu.memory_space<vmem>>, vector<1x1x256xf32>
    %7 = vector.shape_cast %6 : vector<1x1x256xf32> to vector<1x256xf32>
    %c3 = arith.constant 3 : index
    %c0_9 = arith.constant 0 : index
    %c0_10 = arith.constant 0 : index
    %8 = vector.load %arg6[%c3, %c0_9, %c0_10] : memref<9x1x256xf32, #tpu.memory_space<vmem>>, vector<1x1x256xf32>
    %9 = vector.shape_cast %8 : vector<1x1x256xf32> to vector<1x256xf32>
    %c4 = arith.constant 4 : index
    %c0_11 = arith.constant 0 : index
    %c0_12 = arith.constant 0 : index
    %10 = vector.load %arg6[%c4, %c0_11, %c0_12] : memref<9x1x256xf32, #tpu.memory_space<vmem>>, vector<1x1x256xf32>
    %11 = vector.shape_cast %10 : vector<1x1x256xf32> to vector<1x256xf32>
    %c5 = arith.constant 5 : index
    %c0_13 = arith.constant 0 : index
    %c0_14 = arith.constant 0 : index
    %12 = vector.load %arg6[%c5, %c0_13, %c0_14] : memref<9x1x256xf32, #tpu.memory_space<vmem>>, vector<1x1x256xf32>
    %13 = vector.shape_cast %12 : vector<1x1x256xf32> to vector<1x256xf32>
    %c6 = arith.constant 6 : index
    %c0_15 = arith.constant 0 : index
    %c0_16 = arith.constant 0 : index
    %14 = vector.load %arg6[%c6, %c0_15, %c0_16] : memref<9x1x256xf32, #tpu.memory_space<vmem>>, vector<1x1x256xf32>
    %15 = vector.shape_cast %14 : vector<1x1x256xf32> to vector<1x256xf32>
    %c7 = arith.constant 7 : index
    %c0_17 = arith.constant 0 : index
    %c0_18 = arith.constant 0 : index
    %16 = vector.load %arg6[%c7, %c0_17, %c0_18] : memref<9x1x256xf32, #tpu.memory_space<vmem>>, vector<1x1x256xf32>
    %17 = vector.shape_cast %16 : vector<1x1x256xf32> to vector<1x256xf32>
    %c8 = arith.constant 8 : index
    %c0_19 = arith.constant 0 : index
    %c0_20 = arith.constant 0 : index
    %18 = vector.load %arg6[%c8, %c0_19, %c0_20] : memref<9x1x256xf32, #tpu.memory_space<vmem>>, vector<1x1x256xf32>
    %19 = vector.shape_cast %18 : vector<1x1x256xf32> to vector<1x256xf32>
    %c0_21 = arith.constant 0 : index
    %c0_22 = arith.constant 0 : index
    %20 = vector.load %arg3[%c0_21, %c0_22] : memref<8x1xf32, #tpu.memory_space<vmem>>, vector<8x1xf32>
    %21 = vector.shape_cast %20 : vector<8x1xf32> to vector<8x1xf32>
    %22 = vector.broadcast %21 : vector<8x1xf32> to vector<8x256xf32>
    %c17_i32 = arith.constant 17 : i32
    %23 = tpu.dynamic_rotate %1 by %c17_i32 dim 1 : vector<4x256xf32>, i32 -> vector<4x256xf32>
    %24 = vector.broadcast %3 : vector<1x256xf32> to vector<4x256xf32>
    %25 = arith.mulf %23, %24 : vector<4x256xf32>
    %c0_23 = arith.constant 0 : index
    %c0_24 = arith.constant 0 : index
    %c0_25 = arith.constant 0 : index
    %26 = vector.load %arg2[%c0_23, %c0_24, %c0_25] : memref<9x8x4xf32, #tpu.memory_space<vmem>>, vector<1x8x4xf32>
    %27 = vector.shape_cast %26 : vector<1x8x4xf32> to vector<8x4xf32>
    %cst = arith.constant dense<0.000000e+00> : vector<8x256xf32>
    %28 = tpu.matmul %27, %25, %cst {dimension_numbers = #tpu.dot_dimension_numbers<[1], [0], [0], [1], [0, 0, 1, 1], [], []>} : vector<8x4xf32>, vector<4x256xf32>, vector<8x256xf32> -> vector<8x256xf32>
    %29 = arith.addf %22, %28 : vector<8x256xf32>
    %c16_i32 = arith.constant 16 : i32
    %30 = tpu.dynamic_rotate %1 by %c16_i32 dim 1 : vector<4x256xf32>, i32 -> vector<4x256xf32>
    %31 = vector.broadcast %5 : vector<1x256xf32> to vector<4x256xf32>
    %32 = arith.mulf %30, %31 : vector<4x256xf32>
    %c1_26 = arith.constant 1 : index
    %c0_27 = arith.constant 0 : index
    %c0_28 = arith.constant 0 : index
    %33 = vector.load %arg2[%c1_26, %c0_27, %c0_28] : memref<9x8x4xf32, #tpu.memory_space<vmem>>, vector<1x8x4xf32>
    %34 = vector.shape_cast %33 : vector<1x8x4xf32> to vector<8x4xf32>
    %cst_29 = arith.constant dense<0.000000e+00> : vector<8x256xf32>
    %35 = tpu.matmul %34, %32, %cst_29 {dimension_numbers = #tpu.dot_dimension_numbers<[1], [0], [0], [1], [0, 0, 1, 1], [], []>} : vector<8x4xf32>, vector<4x256xf32>, vector<8x256xf32> -> vector<8x256xf32>
    %36 = arith.addf %29, %35 : vector<8x256xf32>
    %c15_i32 = arith.constant 15 : i32
    %37 = tpu.dynamic_rotate %1 by %c15_i32 dim 1 : vector<4x256xf32>, i32 -> vector<4x256xf32>
    %38 = vector.broadcast %7 : vector<1x256xf32> to vector<4x256xf32>
    %39 = arith.mulf %37, %38 : vector<4x256xf32>
    %c2_30 = arith.constant 2 : index
    %c0_31 = arith.constant 0 : index
    %c0_32 = arith.constant 0 : index
    %40 = vector.load %arg2[%c2_30, %c0_31, %c0_32] : memref<9x8x4xf32, #tpu.memory_space<vmem>>, vector<1x8x4xf32>
    %41 = vector.shape_cast %40 : vector<1x8x4xf32> to vector<8x4xf32>
    %cst_33 = arith.constant dense<0.000000e+00> : vector<8x256xf32>
    %42 = tpu.matmul %41, %39, %cst_33 {dimension_numbers = #tpu.dot_dimension_numbers<[1], [0], [0], [1], [0, 0, 1, 1], [], []>} : vector<8x4xf32>, vector<4x256xf32>, vector<8x256xf32> -> vector<8x256xf32>
    %43 = arith.addf %36, %42 : vector<8x256xf32>
    %c1_i32 = arith.constant 1 : i32
    %44 = tpu.dynamic_rotate %1 by %c1_i32 dim 1 : vector<4x256xf32>, i32 -> vector<4x256xf32>
    %45 = vector.broadcast %9 : vector<1x256xf32> to vector<4x256xf32>
    %46 = arith.mulf %44, %45 : vector<4x256xf32>
    %c3_34 = arith.constant 3 : index
    %c0_35 = arith.constant 0 : index
    %c0_36 = arith.constant 0 : index
    %47 = vector.load %arg2[%c3_34, %c0_35, %c0_36] : memref<9x8x4xf32, #tpu.memory_space<vmem>>, vector<1x8x4xf32>
    %48 = vector.shape_cast %47 : vector<1x8x4xf32> to vector<8x4xf32>
    %cst_37 = arith.constant dense<0.000000e+00> : vector<8x256xf32>
    %49 = tpu.matmul %48, %46, %cst_37 {dimension_numbers = #tpu.dot_dimension_numbers<[1], [0], [0], [1], [0, 0, 1, 1], [], []>} : vector<8x4xf32>, vector<4x256xf32>, vector<8x256xf32> -> vector<8x256xf32>
    %50 = arith.addf %43, %49 : vector<8x256xf32>
    %51 = vector.broadcast %11 : vector<1x256xf32> to vector<4x256xf32>
    %52 = arith.mulf %1, %51 : vector<4x256xf32>
    %c4_38 = arith.constant 4 : index
    %c0_39 = arith.constant 0 : index
    %c0_40 = arith.constant 0 : index
    %53 = vector.load %arg2[%c4_38, %c0_39, %c0_40] : memref<9x8x4xf32, #tpu.memory_space<vmem>>, vector<1x8x4xf32>
    %54 = vector.shape_cast %53 : vector<1x8x4xf32> to vector<8x4xf32>
    %cst_41 = arith.constant dense<0.000000e+00> : vector<8x256xf32>
    %55 = tpu.matmul %54, %52, %cst_41 {dimension_numbers = #tpu.dot_dimension_numbers<[1], [0], [0], [1], [0, 0, 1, 1], [], []>} : vector<8x4xf32>, vector<4x256xf32>, vector<8x256xf32> -> vector<8x256xf32>
    %56 = arith.addf %50, %55 : vector<8x256xf32>
    %c255_i32 = arith.constant 255 : i32
    %57 = tpu.dynamic_rotate %1 by %c255_i32 dim 1 : vector<4x256xf32>, i32 -> vector<4x256xf32>
    %58 = vector.broadcast %13 : vector<1x256xf32> to vector<4x256xf32>
    %59 = arith.mulf %57, %58 : vector<4x256xf32>
    %c5_42 = arith.constant 5 : index
    %c0_43 = arith.constant 0 : index
    %c0_44 = arith.constant 0 : index
    %60 = vector.load %arg2[%c5_42, %c0_43, %c0_44] : memref<9x8x4xf32, #tpu.memory_space<vmem>>, vector<1x8x4xf32>
    %61 = vector.shape_cast %60 : vector<1x8x4xf32> to vector<8x4xf32>
    %cst_45 = arith.constant dense<0.000000e+00> : vector<8x256xf32>
    %62 = tpu.matmul %61, %59, %cst_45 {dimension_numbers = #tpu.dot_dimension_numbers<[1], [0], [0], [1], [0, 0, 1, 1], [], []>} : vector<8x4xf32>, vector<4x256xf32>, vector<8x256xf32> -> vector<8x256xf32>
    %63 = arith.addf %56, %62 : vector<8x256xf32>
    %c241_i32 = arith.constant 241 : i32
    %64 = tpu.dynamic_rotate %1 by %c241_i32 dim 1 : vector<4x256xf32>, i32 -> vector<4x256xf32>
    %65 = vector.broadcast %15 : vector<1x256xf32> to vector<4x256xf32>
    %66 = arith.mulf %64, %65 : vector<4x256xf32>
    %c6_46 = arith.constant 6 : index
    %c0_47 = arith.constant 0 : index
    %c0_48 = arith.constant 0 : index
    %67 = vector.load %arg2[%c6_46, %c0_47, %c0_48] : memref<9x8x4xf32, #tpu.memory_space<vmem>>, vector<1x8x4xf32>
    %68 = vector.shape_cast %67 : vector<1x8x4xf32> to vector<8x4xf32>
    %cst_49 = arith.constant dense<0.000000e+00> : vector<8x256xf32>
    %69 = tpu.matmul %68, %66, %cst_49 {dimension_numbers = #tpu.dot_dimension_numbers<[1], [0], [0], [1], [0, 0, 1, 1], [], []>} : vector<8x4xf32>, vector<4x256xf32>, vector<8x256xf32> -> vector<8x256xf32>
    %70 = arith.addf %63, %69 : vector<8x256xf32>
    %c240_i32 = arith.constant 240 : i32
    %71 = tpu.dynamic_rotate %1 by %c240_i32 dim 1 : vector<4x256xf32>, i32 -> vector<4x256xf32>
    %72 = vector.broadcast %17 : vector<1x256xf32> to vector<4x256xf32>
    %73 = arith.mulf %71, %72 : vector<4x256xf32>
    %c7_50 = arith.constant 7 : index
    %c0_51 = arith.constant 0 : index
    %c0_52 = arith.constant 0 : index
    %74 = vector.load %arg2[%c7_50, %c0_51, %c0_52] : memref<9x8x4xf32, #tpu.memory_space<vmem>>, vector<1x8x4xf32>
    %75 = vector.shape_cast %74 : vector<1x8x4xf32> to vector<8x4xf32>
    %cst_53 = arith.constant dense<0.000000e+00> : vector<8x256xf32>
    %76 = tpu.matmul %75, %73, %cst_53 {dimension_numbers = #tpu.dot_dimension_numbers<[1], [0], [0], [1], [0, 0, 1, 1], [], []>} : vector<8x4xf32>, vector<4x256xf32>, vector<8x256xf32> -> vector<8x256xf32>
    %77 = arith.addf %70, %76 : vector<8x256xf32>
    %c239_i32 = arith.constant 239 : i32
    %78 = tpu.dynamic_rotate %1 by %c239_i32 dim 1 : vector<4x256xf32>, i32 -> vector<4x256xf32>
    %79 = vector.broadcast %19 : vector<1x256xf32> to vector<4x256xf32>
    %80 = arith.mulf %78, %79 : vector<4x256xf32>
    %c8_54 = arith.constant 8 : index
    %c0_55 = arith.constant 0 : index
    %c0_56 = arith.constant 0 : index
    %81 = vector.load %arg2[%c8_54, %c0_55, %c0_56] : memref<9x8x4xf32, #tpu.memory_space<vmem>>, vector<1x8x4xf32>
    %82 = vector.shape_cast %81 : vector<1x8x4xf32> to vector<8x4xf32>
    %cst_57 = arith.constant dense<0.000000e+00> : vector<8x256xf32>
    %83 = tpu.matmul %82, %80, %cst_57 {dimension_numbers = #tpu.dot_dimension_numbers<[1], [0], [0], [1], [0, 0, 1, 1], [], []>} : vector<8x4xf32>, vector<4x256xf32>, vector<8x256xf32> -> vector<8x256xf32>
    %84 = arith.addf %77, %83 : vector<8x256xf32>
    %cst_58 = arith.constant 0.000000e+00 : f32
    %85 = vector.broadcast %cst_58 : f32 to vector<8x256xf32>
    %86 = arith.maximumf %84, %85 : vector<8x256xf32>
    %c0_59 = arith.constant 0 : index
    %c0_60 = arith.constant 0 : index
    %87 = vector.load %arg5[%c0_59, %c0_60] : memref<8x1xf32, #tpu.memory_space<vmem>>, vector<8x1xf32>
    %88 = vector.shape_cast %87 : vector<8x1xf32> to vector<8x1xf32>
    %89 = vector.broadcast %88 : vector<8x1xf32> to vector<8x256xf32>
    %c17_i32_61 = arith.constant 17 : i32
    %90 = tpu.dynamic_rotate %86 by %c17_i32_61 dim 1 : vector<8x256xf32>, i32 -> vector<8x256xf32>
    %91 = vector.broadcast %3 : vector<1x256xf32> to vector<8x256xf32>
    %92 = arith.mulf %90, %91 : vector<8x256xf32>
    %c0_62 = arith.constant 0 : index
    %c0_63 = arith.constant 0 : index
    %c0_64 = arith.constant 0 : index
    %93 = vector.load %arg4[%c0_62, %c0_63, %c0_64] : memref<9x8x8xf32, #tpu.memory_space<vmem>>, vector<1x8x8xf32>
    %94 = vector.shape_cast %93 : vector<1x8x8xf32> to vector<8x8xf32>
    %cst_65 = arith.constant dense<0.000000e+00> : vector<8x256xf32>
    %95 = tpu.matmul %94, %92, %cst_65 {dimension_numbers = #tpu.dot_dimension_numbers<[1], [0], [0], [1], [0, 0, 1, 1], [], []>} : vector<8x8xf32>, vector<8x256xf32>, vector<8x256xf32> -> vector<8x256xf32>
    %96 = arith.addf %89, %95 : vector<8x256xf32>
    %c16_i32_66 = arith.constant 16 : i32
    %97 = tpu.dynamic_rotate %86 by %c16_i32_66 dim 1 : vector<8x256xf32>, i32 -> vector<8x256xf32>
    %98 = vector.broadcast %5 : vector<1x256xf32> to vector<8x256xf32>
    %99 = arith.mulf %97, %98 : vector<8x256xf32>
    %c1_67 = arith.constant 1 : index
    %c0_68 = arith.constant 0 : index
    %c0_69 = arith.constant 0 : index
    %100 = vector.load %arg4[%c1_67, %c0_68, %c0_69] : memref<9x8x8xf32, #tpu.memory_space<vmem>>, vector<1x8x8xf32>
    %101 = vector.shape_cast %100 : vector<1x8x8xf32> to vector<8x8xf32>
    %cst_70 = arith.constant dense<0.000000e+00> : vector<8x256xf32>
    %102 = tpu.matmul %101, %99, %cst_70 {dimension_numbers = #tpu.dot_dimension_numbers<[1], [0], [0], [1], [0, 0, 1, 1], [], []>} : vector<8x8xf32>, vector<8x256xf32>, vector<8x256xf32> -> vector<8x256xf32>
    %103 = arith.addf %96, %102 : vector<8x256xf32>
    %c15_i32_71 = arith.constant 15 : i32
    %104 = tpu.dynamic_rotate %86 by %c15_i32_71 dim 1 : vector<8x256xf32>, i32 -> vector<8x256xf32>
    %105 = vector.broadcast %7 : vector<1x256xf32> to vector<8x256xf32>
    %106 = arith.mulf %104, %105 : vector<8x256xf32>
    %c2_72 = arith.constant 2 : index
    %c0_73 = arith.constant 0 : index
    %c0_74 = arith.constant 0 : index
    %107 = vector.load %arg4[%c2_72, %c0_73, %c0_74] : memref<9x8x8xf32, #tpu.memory_space<vmem>>, vector<1x8x8xf32>
    %108 = vector.shape_cast %107 : vector<1x8x8xf32> to vector<8x8xf32>
    %cst_75 = arith.constant dense<0.000000e+00> : vector<8x256xf32>
    %109 = tpu.matmul %108, %106, %cst_75 {dimension_numbers = #tpu.dot_dimension_numbers<[1], [0], [0], [1], [0, 0, 1, 1], [], []>} : vector<8x8xf32>, vector<8x256xf32>, vector<8x256xf32> -> vector<8x256xf32>
    %110 = arith.addf %103, %109 : vector<8x256xf32>
    %c1_i32_76 = arith.constant 1 : i32
    %111 = tpu.dynamic_rotate %86 by %c1_i32_76 dim 1 : vector<8x256xf32>, i32 -> vector<8x256xf32>
    %112 = vector.broadcast %9 : vector<1x256xf32> to vector<8x256xf32>
    %113 = arith.mulf %111, %112 : vector<8x256xf32>
    %c3_77 = arith.constant 3 : index
    %c0_78 = arith.constant 0 : index
    %c0_79 = arith.constant 0 : index
    %114 = vector.load %arg4[%c3_77, %c0_78, %c0_79] : memref<9x8x8xf32, #tpu.memory_space<vmem>>, vector<1x8x8xf32>
    %115 = vector.shape_cast %114 : vector<1x8x8xf32> to vector<8x8xf32>
    %cst_80 = arith.constant dense<0.000000e+00> : vector<8x256xf32>
    %116 = tpu.matmul %115, %113, %cst_80 {dimension_numbers = #tpu.dot_dimension_numbers<[1], [0], [0], [1], [0, 0, 1, 1], [], []>} : vector<8x8xf32>, vector<8x256xf32>, vector<8x256xf32> -> vector<8x256xf32>
    %117 = arith.addf %110, %116 : vector<8x256xf32>
    %118 = vector.broadcast %11 : vector<1x256xf32> to vector<8x256xf32>
    %119 = arith.mulf %86, %118 : vector<8x256xf32>
    %c4_81 = arith.constant 4 : index
    %c0_82 = arith.constant 0 : index
    %c0_83 = arith.constant 0 : index
    %120 = vector.load %arg4[%c4_81, %c0_82, %c0_83] : memref<9x8x8xf32, #tpu.memory_space<vmem>>, vector<1x8x8xf32>
    %121 = vector.shape_cast %120 : vector<1x8x8xf32> to vector<8x8xf32>
    %cst_84 = arith.constant dense<0.000000e+00> : vector<8x256xf32>
    %122 = tpu.matmul %121, %119, %cst_84 {dimension_numbers = #tpu.dot_dimension_numbers<[1], [0], [0], [1], [0, 0, 1, 1], [], []>} : vector<8x8xf32>, vector<8x256xf32>, vector<8x256xf32> -> vector<8x256xf32>
    %123 = arith.addf %117, %122 : vector<8x256xf32>
    %c255_i32_85 = arith.constant 255 : i32
    %124 = tpu.dynamic_rotate %86 by %c255_i32_85 dim 1 : vector<8x256xf32>, i32 -> vector<8x256xf32>
    %125 = vector.broadcast %13 : vector<1x256xf32> to vector<8x256xf32>
    %126 = arith.mulf %124, %125 : vector<8x256xf32>
    %c5_86 = arith.constant 5 : index
    %c0_87 = arith.constant 0 : index
    %c0_88 = arith.constant 0 : index
    %127 = vector.load %arg4[%c5_86, %c0_87, %c0_88] : memref<9x8x8xf32, #tpu.memory_space<vmem>>, vector<1x8x8xf32>
    %128 = vector.shape_cast %127 : vector<1x8x8xf32> to vector<8x8xf32>
    %cst_89 = arith.constant dense<0.000000e+00> : vector<8x256xf32>
    %129 = tpu.matmul %128, %126, %cst_89 {dimension_numbers = #tpu.dot_dimension_numbers<[1], [0], [0], [1], [0, 0, 1, 1], [], []>} : vector<8x8xf32>, vector<8x256xf32>, vector<8x256xf32> -> vector<8x256xf32>
    %130 = arith.addf %123, %129 : vector<8x256xf32>
    %c241_i32_90 = arith.constant 241 : i32
    %131 = tpu.dynamic_rotate %86 by %c241_i32_90 dim 1 : vector<8x256xf32>, i32 -> vector<8x256xf32>
    %132 = vector.broadcast %15 : vector<1x256xf32> to vector<8x256xf32>
    %133 = arith.mulf %131, %132 : vector<8x256xf32>
    %c6_91 = arith.constant 6 : index
    %c0_92 = arith.constant 0 : index
    %c0_93 = arith.constant 0 : index
    %134 = vector.load %arg4[%c6_91, %c0_92, %c0_93] : memref<9x8x8xf32, #tpu.memory_space<vmem>>, vector<1x8x8xf32>
    %135 = vector.shape_cast %134 : vector<1x8x8xf32> to vector<8x8xf32>
    %cst_94 = arith.constant dense<0.000000e+00> : vector<8x256xf32>
    %136 = tpu.matmul %135, %133, %cst_94 {dimension_numbers = #tpu.dot_dimension_numbers<[1], [0], [0], [1], [0, 0, 1, 1], [], []>} : vector<8x8xf32>, vector<8x256xf32>, vector<8x256xf32> -> vector<8x256xf32>
    %137 = arith.addf %130, %136 : vector<8x256xf32>
    %c240_i32_95 = arith.constant 240 : i32
    %138 = tpu.dynamic_rotate %86 by %c240_i32_95 dim 1 : vector<8x256xf32>, i32 -> vector<8x256xf32>
    %139 = vector.broadcast %17 : vector<1x256xf32> to vector<8x256xf32>
    %140 = arith.mulf %138, %139 : vector<8x256xf32>
    %c7_96 = arith.constant 7 : index
    %c0_97 = arith.constant 0 : index
    %c0_98 = arith.constant 0 : index
    %141 = vector.load %arg4[%c7_96, %c0_97, %c0_98] : memref<9x8x8xf32, #tpu.memory_space<vmem>>, vector<1x8x8xf32>
    %142 = vector.shape_cast %141 : vector<1x8x8xf32> to vector<8x8xf32>
    %cst_99 = arith.constant dense<0.000000e+00> : vector<8x256xf32>
    %143 = tpu.matmul %142, %140, %cst_99 {dimension_numbers = #tpu.dot_dimension_numbers<[1], [0], [0], [1], [0, 0, 1, 1], [], []>} : vector<8x8xf32>, vector<8x256xf32>, vector<8x256xf32> -> vector<8x256xf32>
    %144 = arith.addf %137, %143 : vector<8x256xf32>
    %c239_i32_100 = arith.constant 239 : i32
    %145 = tpu.dynamic_rotate %86 by %c239_i32_100 dim 1 : vector<8x256xf32>, i32 -> vector<8x256xf32>
    %146 = vector.broadcast %19 : vector<1x256xf32> to vector<8x256xf32>
    %147 = arith.mulf %145, %146 : vector<8x256xf32>
    %c8_101 = arith.constant 8 : index
    %c0_102 = arith.constant 0 : index
    %c0_103 = arith.constant 0 : index
    %148 = vector.load %arg4[%c8_101, %c0_102, %c0_103] : memref<9x8x8xf32, #tpu.memory_space<vmem>>, vector<1x8x8xf32>
    %149 = vector.shape_cast %148 : vector<1x8x8xf32> to vector<8x8xf32>
    %cst_104 = arith.constant dense<0.000000e+00> : vector<8x256xf32>
    %150 = tpu.matmul %149, %147, %cst_104 {dimension_numbers = #tpu.dot_dimension_numbers<[1], [0], [0], [1], [0, 0, 1, 1], [], []>} : vector<8x8xf32>, vector<8x256xf32>, vector<8x256xf32> -> vector<8x256xf32>
    %151 = arith.addf %144, %150 : vector<8x256xf32>
    %c0_105 = arith.constant 0 : index
    %c0_106 = arith.constant 0 : index
    %152 = vector.load %arg7[%c0_105, %c0_106] : memref<8x4xf32, #tpu.memory_space<vmem>>, vector<8x4xf32>
    %cst_107 = arith.constant dense<0.000000e+00> : vector<8x256xf32>
    %153 = tpu.matmul %152, %1, %cst_107 {dimension_numbers = #tpu.dot_dimension_numbers<[1], [0], [0], [1], [0, 0, 1, 1], [], []>} : vector<8x4xf32>, vector<4x256xf32>, vector<8x256xf32> -> vector<8x256xf32>
    %154 = arith.addf %151, %153 : vector<8x256xf32>
    %cst_108 = arith.constant 0.000000e+00 : f32
    %155 = vector.broadcast %cst_108 : f32 to vector<8x256xf32>
    %156 = arith.maximumf %154, %155 : vector<8x256xf32>
    %c0_109 = arith.constant 0 : index
    %c0_110 = arith.constant 0 : index
    %c0_111 = arith.constant 0 : index
    %157 = vector.load %arg8[%c0_109, %c0_110, %c0_111] : memref<1x8x256xf32, #tpu.memory_space<vmem>>, vector<1x8x256xf32>
    %158 = vector.shape_cast %157 : vector<1x8x256xf32> to vector<8x256xf32>
    %159 = vector.shape_cast %156 : vector<8x256xf32> to vector<1x8x256xf32>
    tpu.vector_store %arg8[%c0_109, %c0_110, %c0_111], %159 {strides = array<i32>} : memref<1x8x256xf32, #tpu.memory_space<vmem>>, vector<1x8x256xf32>,
    return
  }
  func.func @transform_0(%arg0: i32) -> (i32, i32, i32) {
    %c0_i32 = arith.constant 0 : i32
    %c0_i32_0 = arith.constant 0 : i32
    %c0_i32_1 = arith.constant 0 : i32
    return %arg0, %c0_i32, %c0_i32_0 : i32, i32, i32
  }
  func.func @transform_1(%arg0: i32) -> (i32, i32, i32) {
    %c0_i32 = arith.constant 0 : i32
    %c0_i32_0 = arith.constant 0 : i32
    %c0_i32_1 = arith.constant 0 : i32
    %c0_i32_2 = arith.constant 0 : i32
    return %c0_i32, %c0_i32_0, %c0_i32_1 : i32, i32, i32
  }
  func.func @transform_2(%arg0: i32) -> (i32, i32) {
    %c0_i32 = arith.constant 0 : i32
    %c0_i32_0 = arith.constant 0 : i32
    %c0_i32_1 = arith.constant 0 : i32
    return %c0_i32, %c0_i32_0 : i32, i32
  }
  func.func @transform_3(%arg0: i32) -> (i32, i32, i32) {
    %c0_i32 = arith.constant 0 : i32
    %c0_i32_0 = arith.constant 0 : i32
    %c0_i32_1 = arith.constant 0 : i32
    %c0_i32_2 = arith.constant 0 : i32
    return %c0_i32, %c0_i32_0, %c0_i32_1 : i32, i32, i32
  }
  func.func @transform_4(%arg0: i32) -> (i32, i32) {
    %c0_i32 = arith.constant 0 : i32
    %c0_i32_0 = arith.constant 0 : i32
    %c0_i32_1 = arith.constant 0 : i32
    return %c0_i32, %c0_i32_0 : i32, i32
  }
  func.func @transform_5(%arg0: i32) -> (i32, i32, i32) {
    %c0_i32 = arith.constant 0 : i32
    %c0_i32_0 = arith.constant 0 : i32
    %c0_i32_1 = arith.constant 0 : i32
    %c0_i32_2 = arith.constant 0 : i32
    return %c0_i32, %c0_i32_0, %c0_i32_1 : i32, i32, i32
  }
  func.func @transform_6(%arg0: i32) -> (i32, i32) {
    %c0_i32 = arith.constant 0 : i32
    %c0_i32_0 = arith.constant 0 : i32
    %c0_i32_1 = arith.constant 0 : i32
    return %c0_i32, %c0_i32_0 : i32, i32
  }
  func.func @transform_7(%arg0: i32) -> (i32, i32, i32) {
    %c0_i32 = arith.constant 0 : i32
    %c0_i32_0 = arith.constant 0 : i32
    %c0_i32_1 = arith.constant 0 : i32
    return %arg0, %c0_i32, %c0_i32_0 : i32, i32, i32
  }
}

</mosaic_0001>

<llo_original>
// kernel: tpu_custom_call.1
$region0: #{tpu_custom_call.1}
  #allocation0 [shape = 'u32[]', space=smem, size = 0x4, offset = 0x4, fixed_abs, tag = 'smem constant byte address 0x4 - core index']
  #allocation1 [shape = 'u32[144,128]{1,0:T(1,128)}', space=vmem, size = 0x12000, scoped, tag = 'internal scratch']
  %s0 = inlined_call_operand.vmem [shape: f32[2,4,256], index: 0, kind: input, shape index: {}]
  %s1 = inlined_call_operand.vmem [shape: f32[9,8,4], index: 1, kind: input, shape index: {}]
  %s2 = inlined_call_operand.vmem [shape: f32[8,1], index: 2, kind: input, shape index: {}]
  %s3 = inlined_call_operand.vmem [shape: f32[9,8,8], index: 3, kind: input, shape index: {}]
  %s4 = inlined_call_operand.vmem [shape: f32[8,1], index: 4, kind: input, shape index: {}]
  %s5 = inlined_call_operand.vmem [shape: f32[9,1,256], index: 5, kind: input, shape index: {}]
  %s6 = inlined_call_operand.vmem [shape: f32[8,4], index: 6, kind: input, shape index: {}]
  %s7 = inlined_call_operand.hbm [shape: f32[2,8,256], index: 7, kind: output, shape index: {}]
  %s8 = sld [smem:[#allocation0]]
  $region61: #{tpu_custom_call.1} parent=0
    _
  %s10 = ssub.s32 1, %s8
  %s11 = scalar_select 0, %s10, %s8
  $region1: #{tpu_custom_call.1} parent=0
    #allocation2 [shape = 'u8[16384]{0}', space=vmem, size = 0x4000, scoped, tag = 'output window, operand 0']
    #allocation3 [shape = 's32[2]{0}', space=sflag, size = 0x8, scoped, tag = 'scoped memory for tpu_custom_call.1']
    %12 = vsyncpa [#allocation3], 0
    %s13 = scalar_lea.sflag [#allocation3], 1
    %14 = vsyncpa %s13, 0
    loop: start=0, step=1, limit=4
    $region2: #{tpu_custom_call.1} parent=1 // loop_pre_header
      _
    $region3: #{tpu_custom_call.1} parent=1 // loop_header
      %s16 = sphi 0, %s20
      %p17 = scmp.ge.s32.totalorder %s16, 4
      %s26 = sphi 0, %s28
      %s29 = sphi 0, %s26
      %s30 = sphi 0, %s29
      %s46 = sphi 0, %s30
      %s50 = sphi 0, %s50
      %s52 = sphi 0, %s50
      %s53 = sphi 0, %s52
      %s67 = sphi 0, %s53
      %s71 = sphi 0, %s71
      %s73 = sphi 0, %s71
      %s74 = sphi 0, %s73
      %s88 = sphi 0, %s74
      %s92 = sphi 0, %s92
      %s94 = sphi 0, %s92
      %s95 = sphi 0, %s94
      %s109 = sphi 0, %s95
      %s113 = sphi 0, %s113
      %s115 = sphi 0, %s113
      %s116 = sphi 0, %s115
      %s130 = sphi 0, %s116
      %s134 = sphi 0, %s134
      %s136 = sphi 0, %s134
      %s137 = sphi 0, %s136
      %s151 = sphi 0, %s137
      %s155 = sphi 0, %s155
      %s157 = sphi 0, %s155
      %s158 = sphi 0, %s157
      %s172 = sphi 0, %s158
      %s178 = sphi 0, %s180
      %s181 = sphi 0, %s178
      %s182 = sphi 0, %s181
      %s198 = sphi 0, %s182
    $region4: #{tpu_custom_call.1} parent=1 // loop_header_branch
      %19 = sbr.rel (%p17) target = $region8
    $region5: #{tpu_custom_call.1} parent=1 // loop_body
      %s21 = ssub.s32 %s16, 1
      %s22 = ssub.s32 %s16, 2
      %s23 = sadd.s32 %s16, 1
      %s24 = ssub.s32 %s16, %s23
      %p25 = scmp.eq.s32.totalorder %s24, 0
      %s27 = sadd.s32 %s26, 1
      %s28 = scalar_select %p25, %s26, %s27
      %p31 = pneg %p25
      %p32 = scmp.eq.s32.totalorder %s16, 1
      %p33 = por %p31, %p32
      %p34 = scmp.ne.s32.totalorder %s26, %s29
      %p35 = scmp.eq.s32.totalorder %s16, 0
      %p36 = por %p34, %p35
      %p37 = scmp.ne.s32.totalorder %s26, %s29
      %p38 = scmp.eq.s32.totalorder %s21, 1
      %p39 = por %p37, %p38
      %p40 = scmp.ne.s32.totalorder %s29, %s30
      %p41 = scmp.eq.s32.totalorder %s21, 0
      %p42 = por %p40, %p41
      %p43 = scmp.ne.s32.totalorder %s29, %s30
      %p44 = scmp.eq.s32.totalorder %s22, 1
      %p45 = por %p43, %p44
      %p47 = scmp.ne.s32.totalorder %s30, %s46
      %p48 = scmp.eq.s32.totalorder %s22, 0
      %p49 = por %p47, %p48
      %s51 = sadd.s32 %s50, 1
      %p54 = scmp.eq.s32.totalorder %s16, 1
      %p55 = scmp.ne.s32.totalorder %s50, %s52
      %p56 = scmp.eq.s32.totalorder %s16, 0
      %p57 = por %p55, %p56
      %p58 = scmp.ne.s32.totalorder %s50, %s52
      %p59 = scmp.eq.s32.totalorder %s21, 1
      %p60 = por %p58, %p59
      %p61 = scmp.ne.s32.totalorder %s52, %s53
      %p62 = scmp.eq.s32.totalorder %s21, 0
      %p63 = por %p61, %p62
      %p64 = scmp.ne.s32.totalorder %s52, %s53
      %p65 = scmp.eq.s32.totalorder %s22, 1
      %p66 = por %p64, %p65
      %p68 = scmp.ne.s32.totalorder %s53, %s67
      %p69 = scmp.eq.s32.totalorder %s22, 0
      %p70 = por %p68, %p69
      %s72 = sadd.s32 %s71, 1
      %p75 = scmp.eq.s32.totalorder %s16, 1
      %p76 = scmp.ne.s32.totalorder %s71, %s73
      %p77 = scmp.eq.s32.totalorder %s16, 0
      %p78 = por %p76, %p77
      %p79 = scmp.ne.s32.totalorder %s71, %s73
      %p80 = scmp.eq.s32.totalorder %s21, 1
      %p81 = por %p79, %p80
      %p82 = scmp.ne.s32.totalorder %s73, %s74
      %p83 = scmp.eq.s32.totalorder %s21, 0
      %p84 = por %p82, %p83
      %p85 = scmp.ne.s32.totalorder %s73, %s74
      %p86 = scmp.eq.s32.totalorder %s22, 1
      %p87 = por %p85, %p86
      %p89 = scmp.ne.s32.totalorder %s74, %s88
      %p90 = scmp.eq.s32.totalorder %s22, 0
      %p91 = por %p89, %p90
      %s93 = sadd.s32 %s92, 1
      %p96 = scmp.eq.s32.totalorder %s16, 1
      %p97 = scmp.ne.s32.totalorder %s92, %s94
      %p98 = scmp.eq.s32.totalorder %s16, 0
      %p99 = por %p97, %p98
      %p100 = scmp.ne.s32.totalorder %s92, %s94
      %p101 = scmp.eq.s32.totalorder %s21, 1
      %p102 = por %p100, %p101
      %p103 = scmp.ne.s32.totalorder %s94, %s95
      %p104 = scmp.eq.s32.totalorder %s21, 0
      %p105 = por %p103, %p104
      %p106 = scmp.ne.s32.totalorder %s94, %s95
      %p107 = scmp.eq.s32.totalorder %s22, 1
      %p108 = por %p106, %p107
      %p110 = scmp.ne.s32.totalorder %s95, %s109
      %p111 = scmp.eq.s32.totalorder %s22, 0
      %p112 = por %p110, %p111
      %s114 = sadd.s32 %s113, 1
      %p117 = scmp.eq.s32.totalorder %s16, 1
      %p118 = scmp.ne.s32.totalorder %s113, %s115
      %p119 = scmp.eq.s32.totalorder %s16, 0
      %p120 = por %p118, %p119
      %p121 = scmp.ne.s32.totalorder %s113, %s115
      %p122 = scmp.eq.s32.totalorder %s21, 1
      %p123 = por %p121, %p122
      %p124 = scmp.ne.s32.totalorder %s115, %s116
      %p125 = scmp.eq.s32.totalorder %s21, 0
      %p126 = por %p124, %p125
      %p127 = scmp.ne.s32.totalorder %s115, %s116
      %p128 = scmp.eq.s32.totalorder %s22, 1
      %p129 = por %p127, %p128
      %p131 = scmp.ne.s32.totalorder %s116, %s130
      %p132 = scmp.eq.s32.totalorder %s22, 0
      %p133 = por %p131, %p132
      %s135 = sadd.s32 %s134, 1
      %p138 = scmp.eq.s32.totalorder %s16, 1
      %p139 = scmp.ne.s32.totalorder %s134, %s136
      %p140 = scmp.eq.s32.totalorder %s16, 0
      %p141 = por %p139, %p140
      %p142 = scmp.ne.s32.totalorder %s134, %s136
      %p143 = scmp.eq.s32.totalorder %s21, 1
      %p144 = por %p142, %p143
      %p145 = scmp.ne.s32.totalorder %s136, %s137
      %p146 = scmp.eq.s32.totalorder %s21, 0
      %p147 = por %p145, %p146
      %p148 = scmp.ne.s32.totalorder %s136, %s137
      %p149 = scmp.eq.s32.totalorder %s22, 1
      %p150 = por %p148, %p149
      %p152 = scmp.ne.s32.totalorder %s137, %s151
      %p153 = scmp.eq.s32.totalorder %s22, 0
      %p154 = por %p152, %p153
      %s156 = sadd.s32 %s155, 1
      %p159 = scmp.eq.s32.totalorder %s16, 1
      %p160 = scmp.ne.s32.totalorder %s155, %s157
      %p161 = scmp.eq.s32.totalorder %s16, 0
      %p162 = por %p160, %p161
      %p163 = scmp.ne.s32.totalorder %s155, %s157
      %p164 = scmp.eq.s32.totalorder %s21, 1
      %p165 = por %p163, %p164
      %p166 = scmp.ne.s32.totalorder %s157, %s158
      %p167 = scmp.eq.s32.totalorder %s21, 0
      %p168 = por %p166, %p167
      %p169 = scmp.ne.s32.totalorder %s157, %s158
      %p170 = scmp.eq.s32.totalorder %s22, 1
      %p171 = por %p169, %p170
      %p173 = scmp.ne.s32.totalorder %s158, %s172
      %p174 = scmp.eq.s32.totalorder %s22, 0
      %p175 = por %p173, %p174
      %s176 = ssub.s32 %s16, %s23
      %p177 = scmp.eq.s32.totalorder %s176, 0
      %s179 = sadd.s32 %s178, 1
      %s180 = scalar_select %p177, %s178, %s179
      %p183 = pneg %p177
      %p184 = scmp.eq.s32.totalorder %s16, 1
      %p185 = por %p183, %p184
      %p186 = scmp.ne.s32.totalorder %s178, %s181
      %p187 = scmp.eq.s32.totalorder %s16, 0
      %p188 = por %p186, %p187
      %p189 = scmp.ne.s32.totalorder %s178, %s181
      %p190 = scmp.eq.s32.totalorder %s21, 1
      %p191 = por %p189, %p190
      %p192 = scmp.ne.s32.totalorder %s181, %s182
      %p193 = scmp.eq.s32.totalorder %s21, 0
      %p194 = por %p192, %p193
      %p195 = scmp.ne.s32.totalorder %s181, %s182
      %p196 = scmp.eq.s32.totalorder %s22, 1
      %p197 = por %p195, %p196
      %p199 = scmp.ne.s32.totalorder %s182, %s198
      %p200 = scmp.eq.s32.totalorder %s22, 0
      %p201 = por %p199, %p200
      %p202 = scmp.le.s32.totalorder 1, %s16
      %p203 = scmp.lt.s32.totalorder %s16, 3
      %p204 = pnand %p202, %p203
      %p205 = pneg %p204
      // Predicated region
      $region9: #{tpu_custom_call.1} parent=5 // pred_check
        _
      $region10: #{tpu_custom_call.1} parent=5 // pred_check_branch
        %207 = sbr.rel (%p204) target = $region12
      $region11: #{tpu_custom_call.1} parent=5 // pred_region
        %s208 = ssub.s32 %s16, 1
        // Predicated region
        $region13: #{tpu_custom_call.1} parent=11 // pred_check
          %p209 = pneg %p63
        $region14: #{tpu_custom_call.1} parent=11 // pred_check_branch
          %211 = sbr.rel (%p209) target = $region16
        $region15: #{tpu_custom_call.1} parent=11 // pred_region
          _
        $region16: #{tpu_custom_call.1} parent=11 // pred_fallthru
          _
        // Predicated region
        $region17: #{tpu_custom_call.1} parent=11 // pred_check
          %p212 = pneg %p84
        $region18: #{tpu_custom_call.1} parent=11 // pred_check_branch
          %214 = sbr.rel (%p212) target = $region20
        $region19: #{tpu_custom_call.1} parent=11 // pred_region
          _
        $region20: #{tpu_custom_call.1} parent=11 // pred_fallthru
          _
        // Predicated region
        $region21: #{tpu_custom_call.1} parent=11 // pred_check
          %p215 = pneg %p105
        $region22: #{tpu_custom_call.1} parent=11 // pred_check_branch
          %217 = sbr.rel (%p215) target = $region24
        $region23: #{tpu_custom_call.1} parent=11 // pred_region
          _
        $region24: #{tpu_custom_call.1} parent=11 // pred_fallthru
          _
        // Predicated region
        $region25: #{tpu_custom_call.1} parent=11 // pred_check
          %p218 = pneg %p126
        $region26: #{tpu_custom_call.1} parent=11 // pred_check_branch
          %220 = sbr.rel (%p218) target = $region28
        $region27: #{tpu_custom_call.1} parent=11 // pred_region
          _
        $region28: #{tpu_custom_call.1} parent=11 // pred_fallthru
          _
        // Predicated region
        $region29: #{tpu_custom_call.1} parent=11 // pred_check
          %p221 = pneg %p147
        $region30: #{tpu_custom_call.1} parent=11 // pred_check_branch
          %223 = sbr.rel (%p221) target = $region32
        $region31: #{tpu_custom_call.1} parent=11 // pred_region
          _
        $region32: #{tpu_custom_call.1} parent=11 // pred_fallthru
          _
        // Predicated region
        $region33: #{tpu_custom_call.1} parent=11 // pred_check
          %p224 = pneg %p168
        $region34: #{tpu_custom_call.1} parent=11 // pred_check_branch
          %226 = sbr.rel (%p224) target = $region36
        $region35: #{tpu_custom_call.1} parent=11 // pred_region
          _
        $region36: #{tpu_custom_call.1} parent=11 // pred_fallthru
          _
      $region12: #{tpu_custom_call.1} parent=5 // pred_fallthru
        _
      %p227 = scmp.lt.s32.totalorder %s16, 2
      // Predicated region
      $region37: #{tpu_custom_call.1} parent=5 // pred_check
        %p228 = pneg %p227
      $region38: #{tpu_custom_call.1} parent=5 // pred_check_branch
        %230 = sbr.rel (%p228) target = $region40
      $region39: #{tpu_custom_call.1} parent=5 // pred_region
        // Predicated region
        $region41: #{tpu_custom_call.1} parent=39 // pred_check
          %p231 = pneg %p36
        $region42: #{tpu_custom_call.1} parent=39 // pred_check_branch
          %233 = sbr.rel (%p231) target = $region44
        $region43: #{tpu_custom_call.1} parent=39 // pred_region
          %p234 = scmp.lt.s32.totalorder %s16, 1
          %s235 = scalar_select %p234, %s16, 1
          %s236 = smul.addr %s235, 2
          %s237 = smul.addr %s236, 4
          %s238 = scalar_lea.vmem %s0, %s237
        $region44: #{tpu_custom_call.1} parent=39 // pred_fallthru
          _
      $region40: #{tpu_custom_call.1} parent=5 // pred_fallthru
        _
      %p239 = scmp.le.s32.totalorder 1, %s16
      %p240 = scmp.lt.s32.totalorder %s16, 3
      %p241 = pnand %p239, %p240
      %p242 = pneg %p241
      // Predicated region
      $region45: #{tpu_custom_call.1} parent=5 // pred_check
        _
      $region46: #{tpu_custom_call.1} parent=5 // pred_check_branch
        %244 = sbr.rel (%p241) target = $region48
      $region47: #{tpu_custom_call.1} parent=5 // pred_region
        %s245 = ssub.s32 %s16, 1
        %p246 = scmp.lt.s32.totalorder %s21, 1
        %s247 = scalar_select %p246, %s21, 1
        %s248 = smul.addr %s247, 2
        %s249 = smul.addr %s248, 4
        %s250 = scalar_lea.vmem %s0, %s249
        %p251 = pneg %p42
        %p252 = pneg %p39
        %p253 = pneg %p63
        %p254 = pneg %p60
        %p255 = pneg %p84
        %p256 = pneg %p81
        %p257 = pneg %p105
        %p258 = pneg %p102
        %p259 = pneg %p126
        %p260 = pneg %p123
        %p261 = pneg %p147
        %p262 = pneg %p144
        %p263 = pneg %p168
        %p264 = pneg %p165
        %p265 = pneg %p194
        %p266 = pneg %p191
        %s267 = sand.u32 %s181, 1
        %s268 = scalar_lea.sflag [#allocation3], %s267
        %s269 = sand.u32 %s181, 1
        %s270 = smul.addr %s269, 16
        %s271 = scalar_lea.vmem [#allocation2], %s270
        %p272 = scmp.lt.s32.totalorder %s21, 1
        %s273 = scalar_select %p272, %s21, 1
        %s274 = smul.addr %s273, 2
        %s275 = smul.addr %s274, 4
        %s276 = scalar_lea.vmem %s0, %s275
        %v277 = vld [vmem:[%s276] sm:$0xff]
        %v278 = vld [vmem:[%s5] sm:$0x3]
        %s279 = scalar_lea.vmem %s5, 2
        %v280 = vld [vmem:[%s279] sm:$0x3]
        %s281 = scalar_lea.vmem %s5, 4
        %v282 = vld [vmem:[%s281] sm:$0x3]
        %s283 = scalar_lea.vmem %s5, 6
        %v284 = vld [vmem:[%s283] sm:$0x3]
        %s285 = scalar_lea.vmem %s5, 8
        %v286 = vld [vmem:[%s285] sm:$0x3]
        %s287 = scalar_lea.vmem %s5, 10
        %v288 = vld [vmem:[%s287] sm:$0x3]
        %s289 = scalar_lea.vmem %s5, 12
        %v290 = vld [vmem:[%s289] sm:$0x3]
        %s291 = scalar_lea.vmem %s5, 14
        %v292 = vld [vmem:[%s291] sm:$0x3]
        %s293 = scalar_lea.vmem %s5, 16
        %v294 = vld [vmem:[%s293] sm:$0x3]
        %v295 = vld [vmem:[%s2] sm:$0xff]
        %297 = vset.pattern.permute.xlu0 0
        %298 = vperm.xlu0 %297, %v295
        %v299 = vpop.permute.xlu0 %298
        %v302 = vcombine.high %v277, %v277
        %304 = vrot.lane.b32.xlu0 %v277, 17
        %v305 = vpop.permute.xlu0 %304
        %306 = vrot.lane.b32.xlu0 %v302, 17
        %v307 = vpop.permute.xlu0 %306
        %v308 = vlaneseq
        %v309 = vand.u32 %v308, 127
        %vm310 = vcmp.lt.s32.totalorder %v309, 17
        %v311 = vsel %vm310, %v305, %v307
        %v312 = vsel %vm310, %v307, %v305
        %v314 = vlaneseq
        %v315 = vshrl.u32 %v314, 7
        %v316 = vsub.s32 0, %v315
        %v317 = vrot.slane %v278, %v316
        %v318 = vlaneseq
        %v319 = vshrl.u32 %v318, 7
        %v320 = vsub.s32 1, %v319
        %v321 = vrot.slane %v278, %v320
        %v324 = vmul.f32 %v312, %v317
        %v325 = vmul.f32 %v311, %v321
        %v326 = vld [vmem:[%s1] sm:$0xff]
        %vm327 = vcmask 31744
        %v329 = vsel %vm327, %v326, 0
        %vm331 = vcmask 1043456
        %v333 = vsel %vm331, %v324, 0
        %v336 = vsel %vm331, %v325, 0
        %338 = vmatprep.subr.mxu0 %v336
        %339 = vmatpush1.msra.mxu0 %v333
        %340 = vmatprep.subr.mxu0 0.0
        %341 = vmatpush1.msra.mxu0 0.0
        %342 = vmatprep.subr.mxu0 0.0
        %343 = vmatpush1.msra.mxu0 0.0
        %344 = vmatprep.subr.mxu0 0.0
        %345 = vmatpush1.msra.mxu0 0.0
        %346 = vmatprep.subr.mxu0 0.0
        %347 = vmatpush1.msra.mxu0 0.0
        %348 = vmatprep.subr.mxu0 0.0
        %349 = vmatpush1.msra.mxu0 0.0
        %350 = vmatprep.subr.mxu0 0.0
        %351 = vmatpush1.msra.mxu0 0.0
        %352 = vmatprep.subr.mxu0 0.0
        %353 = vmatpush1.msra.mxu0 0.0
        %354 = vmatprep.subr.mxu0 0.0
        %355 = vmatpush1.msra.mxu0 0.0
        %356 = vmatprep.subr.mxu0 0.0
        %357 = vmatpush1.msra.mxu0 0.0
        %358 = vmatprep.subr.mxu0 0.0
        %359 = vmatpush1.msra.mxu0 0.0
        %360 = vmatprep.subr.mxu0 0.0
        %361 = vmatpush1.msra.mxu0 0.0
        %362 = vmatprep.subr.mxu0 0.0
        %363 = vmatpush1.msra.mxu0 0.0
        %364 = vmatprep.subr.mxu0 0.0
        %365 = vmatpush1.msra.mxu0 0.0
        %366 = vmatprep.subr.mxu0 0.0
        %367 = vmatpush1.msra.mxu0 0.0
        %368 = vmatprep.subr.mxu0 0.0
        %369 = vmatpush1.msra.mxu0 0.0
        %370 = vmatprep.subr.mxu0 0.0
        %371 = vmatpush1.msra.mxu0 0.0
        %372 = vmatprep.subr.mxu0 0.0
        %373 = vmatpush1.msra.mxu0 0.0
        %374 = vmatprep.subr.mxu0 0.0
        %375 = vmatpush1.msra.mxu0 0.0
        %376 = vmatprep.subr.mxu0 0.0
        %377 = vmatpush1.msra.mxu0 0.0
        %378 = vmatprep.subr.mxu0 0.0
        %379 = vmatpush1.msra.mxu0 0.0
        %380 = vmatprep.subr.mxu0 0.0
        %381 = vmatpush1.msra.mxu0 0.0
        %382 = vmatprep.subr.mxu0 0.0
        %383 = vmatpush1.msra.mxu0 0.0
        %384 = vmatprep.subr.mxu0 0.0
        %385 = vmatpush1.msra.mxu0 0.0
        %386 = vmatprep.subr.mxu0 0.0
        %387 = vmatpush1.msra.mxu0 0.0
        %388 = vmatprep.subr.mxu0 0.0
        %389 = vmatpush1.msra.mxu0 0.0
        %390 = vmatprep.subr.mxu0 0.0
        %391 = vmatpush1.msra.mxu0 0.0
        %392 = vmatprep.subr.mxu0 0.0
        %393 = vmatpush1.msra.mxu0 0.0
        %394 = vmatprep.subr.mxu0 0.0
        %395 = vmatpush1.msra.mxu0 0.0
        %396 = vmatprep.subr.mxu0 0.0
        %397 = vmatpush1.msra.mxu0 0.0
        %398 = vmatprep.subr.mxu0 0.0
        %399 = vmatpush1.msra.mxu0 0.0
        %400 = vmatprep.subr.mxu0 0.0
        %401 = vmatpush1.msra.mxu0 0.0
        %402 = vmatprep.mubr.f32.mxu0 0.0
        %403 = vmatmul.mubr.f32.gmra.mrb[0].mxu0 %v329
        %v404 = vpop.f32.mrb[0].mxu0
        %v405 = vadd.f32 0.0, %v404
        %v406 = vpop.f32.mrb[0].mxu0
        %v407 = vadd.f32 0.0, %v406
        %408 = vdwg.mxu0
        %v409 = vadd.f32 %v299, %v405
        %v410 = vadd.f32 %v299, %v407
        %411 = vrot.lane.b32.xlu0 %v277, 16
        %v412 = vpop.permute.xlu0 %411
        %413 = vrot.lane.b32.xlu0 %v302, 16
        %v414 = vpop.permute.xlu0 %413
        %vm415 = vcmp.lt.s32.totalorder %v309, 16
        %v416 = vsel %vm415, %v412, %v414
        %v417 = vsel %vm415, %v414, %v412
        %v419 = vlaneseq
        %v420 = vshrl.u32 %v419, 7
        %v421 = vsub.s32 0, %v420
        %v422 = vrot.slane %v280, %v421
        %v423 = vlaneseq
        %v424 = vshrl.u32 %v423, 7
        %v425 = vsub.s32 1, %v424
        %v426 = vrot.slane %v280, %v425
        %v429 = vmul.f32 %v417, %v422
        %v430 = vmul.f32 %v416, %v426
        %s431 = scalar_lea.vmem %s1, 8
        %v432 = vld [vmem:[%s431] sm:$0xff]
        %v434 = vsel %vm327, %v432, 0
        %v437 = vsel %vm331, %v429, 0
        %v440 = vsel %vm331, %v430, 0
        %442 = vmatprep.subr.mxu0 %v440
        %443 = vmatpush1.msra.mxu0 %v437
        %444 = vmatprep.subr.mxu0 0.0
        %445 = vmatpush1.msra.mxu0 0.0
        %446 = vmatprep.subr.mxu0 0.0
        %447 = vmatpush1.msra.mxu0 0.0
        %448 = vmatprep.subr.mxu0 0.0
        %449 = vmatpush1.msra.mxu0 0.0
        %450 = vmatprep.subr.mxu0 0.0
        %451 = vmatpush1.msra.mxu0 0.0
        %452 = vmatprep.subr.mxu0 0.0
        %453 = vmatpush1.msra.mxu0 0.0
        %454 = vmatprep.subr.mxu0 0.0
        %455 = vmatpush1.msra.mxu0 0.0
        %456 = vmatprep.subr.mxu0 0.0
        %457 = vmatpush1.msra.mxu0 0.0
        %458 = vmatprep.subr.mxu0 0.0
        %459 = vmatpush1.msra.mxu0 0.0
        %460 = vmatprep.subr.mxu0 0.0
        %461 = vmatpush1.msra.mxu0 0.0
        %462 = vmatprep.subr.mxu0 0.0
        %463 = vmatpush1.msra.mxu0 0.0
        %464 = vmatprep.subr.mxu0 0.0
        %465 = vmatpush1.msra.mxu0 0.0
        %466 = vmatprep.subr.mxu0 0.0
        %467 = vmatpush1.msra.mxu0 0.0
        %468 = vmatprep.subr.mxu0 0.0
        %469 = vmatpush1.msra.mxu0 0.0
        %470 = vmatprep.subr.mxu0 0.0
        %471 = vmatpush1.msra.mxu0 0.0
        %472 = vmatprep.subr.mxu0 0.0
        %473 = vmatpush1.msra.mxu0 0.0
        %474 = vmatprep.subr.mxu0 0.0
        %475 = vmatpush1.msra.mxu0 0.0
        %476 = vmatprep.subr.mxu0 0.0
        %477 = vmatpush1.msra.mxu0 0.0
        %478 = vmatprep.subr.mxu0 0.0
        %479 = vmatpush1.msra.mxu0 0.0
        %480 = vmatprep.subr.mxu0 0.0
        %481 = vmatpush1.msra.mxu0 0.0
        %482 = vmatprep.subr.mxu0 0.0
        %483 = vmatpush1.msra.mxu0 0.0
        %484 = vmatprep.subr.mxu0 0.0
        %485 = vmatpush1.msra.mxu0 0.0
        %486 = vmatprep.subr.mxu0 0.0
        %487 = vmatpush1.msra.mxu0 0.0
        %488 = vmatprep.subr.mxu0 0.0
        %489 = vmatpush1.msra.mxu0 0.0
        %490 = vmatprep.subr.mxu0 0.0
        %491 = vmatpush1.msra.mxu0 0.0
        %492 = vmatprep.subr.mxu0 0.0
        %493 = vmatpush1.msra.mxu0 0.0
        %494 = vmatprep.subr.mxu0 0.0
        %495 = vmatpush1.msra.mxu0 0.0
        %496 = vmatprep.subr.mxu0 0.0
        %497 = vmatpush1.msra.mxu0 0.0
        %498 = vmatprep.subr.mxu0 0.0
        %499 = vmatpush1.msra.mxu0 0.0
        %500 = vmatprep.subr.mxu0 0.0
        %501 = vmatpush1.msra.mxu0 0.0
        %502 = vmatprep.subr.mxu0 0.0
        %503 = vmatpush1.msra.mxu0 0.0
        %504 = vmatprep.subr.mxu0 0.0
        %505 = vmatpush1.msra.mxu0 0.0
        %506 = vmatprep.mubr.f32.mxu0 0.0
        %507 = vmatmul.mubr.f32.gmra.mrb[0].mxu0 %v434
        %v508 = vpop.f32.mrb[0].mxu0
        %v509 = vadd.f32 0.0, %v508
        %v510 = vpop.f32.mrb[0].mxu0
        %v511 = vadd.f32 0.0, %v510
        %512 = vdwg.mxu0
        %v513 = vadd.f32 %v409, %v509
        %v514 = vadd.f32 %v410, %v511
        %515 = vrot.lane.b32.xlu0 %v277, 15
        %v516 = vpop.permute.xlu0 %515
        %517 = vrot.lane.b32.xlu0 %v302, 15
        %v518 = vpop.permute.xlu0 %517
        %vm519 = vcmp.lt.s32.totalorder %v309, 15
        %v520 = vsel %vm519, %v516, %v518
        %v521 = vsel %vm519, %v518, %v516
        %v523 = vlaneseq
        %v524 = vshrl.u32 %v523, 7
        %v525 = vsub.s32 0, %v524
        %v526 = vrot.slane %v282, %v525
        %v527 = vlaneseq
        %v528 = vshrl.u32 %v527, 7
        %v529 = vsub.s32 1, %v528
        %v530 = vrot.slane %v282, %v529
        %v533 = vmul.f32 %v521, %v526
        %v534 = vmul.f32 %v520, %v530
        %s535 = scalar_lea.vmem %s1, 16
        %v536 = vld [vmem:[%s535] sm:$0xff]
        %v538 = vsel %vm327, %v536, 0
        %v541 = vsel %vm331, %v533, 0
        %v544 = vsel %vm331, %v534, 0
        %546 = vmatprep.subr.mxu0 %v544
        %547 = vmatpush1.msra.mxu0 %v541
        %548 = vmatprep.subr.mxu0 0.0
        %549 = vmatpush1.msra.mxu0 0.0
        %550 = vmatprep.subr.mxu0 0.0
        %551 = vmatpush1.msra.mxu0 0.0
        %552 = vmatprep.subr.mxu0 0.0
        %553 = vmatpush1.msra.mxu0 0.0
        %554 = vmatprep.subr.mxu0 0.0
        %555 = vmatpush1.msra.mxu0 0.0
        %556 = vmatprep.subr.mxu0 0.0
        %557 = vmatpush1.msra.mxu0 0.0
        %558 = vmatprep.subr.mxu0 0.0
        %559 = vmatpush1.msra.mxu0 0.0
        %560 = vmatprep.subr.mxu0 0.0
        %561 = vmatpush1.msra.mxu0 0.0
        %562 = vmatprep.subr.mxu0 0.0
        %563 = vmatpush1.msra.mxu0 0.0
        %564 = vmatprep.subr.mxu0 0.0
        %565 = vmatpush1.msra.mxu0 0.0
        %566 = vmatprep.subr.mxu0 0.0
        %567 = vmatpush1.msra.mxu0 0.0
        %568 = vmatprep.subr.mxu0 0.0
        %569 = vmatpush1.msra.mxu0 0.0
        %570 = vmatprep.subr.mxu0 0.0
        %571 = vmatpush1.msra.mxu0 0.0
        %572 = vmatprep.subr.mxu0 0.0
        %573 = vmatpush1.msra.mxu0 0.0
        %574 = vmatprep.subr.mxu0 0.0
        %575 = vmatpush1.msra.mxu0 0.0
        %576 = vmatprep.subr.mxu0 0.0
        %577 = vmatpush1.msra.mxu0 0.0
        %578 = vmatprep.subr.mxu0 0.0
        %579 = vmatpush1.msra.mxu0 0.0
        %580 = vmatprep.subr.mxu0 0.0
        %581 = vmatpush1.msra.mxu0 0.0
        %582 = vmatprep.subr.mxu0 0.0
        %583 = vmatpush1.msra.mxu0 0.0
        %584 = vmatprep.subr.mxu0 0.0
        %585 = vmatpush1.msra.mxu0 0.0
        %586 = vmatprep.subr.mxu0 0.0
        %587 = vmatpush1.msra.mxu0 0.0
        %588 = vmatprep.subr.mxu0 0.0
        %589 = vmatpush1.msra.mxu0 0.0
        %590 = vmatprep.subr.mxu0 0.0
        %591 = vmatpush1.msra.mxu0 0.0
        %592 = vmatprep.subr.mxu0 0.0
        %593 = vmatpush1.msra.mxu0 0.0
        %594 = vmatprep.subr.mxu0 0.0
        %595 = vmatpush1.msra.mxu0 0.0
        %596 = vmatprep.subr.mxu0 0.0
        %597 = vmatpush1.msra.mxu0 0.0
        %598 = vmatprep.subr.mxu0 0.0
        %599 = vmatpush1.msra.mxu0 0.0
        %600 = vmatprep.subr.mxu0 0.0
        %601 = vmatpush1.msra.mxu0 0.0
        %602 = vmatprep.subr.mxu0 0.0
        %603 = vmatpush1.msra.mxu0 0.0
        %604 = vmatprep.subr.mxu0 0.0
        %605 = vmatpush1.msra.mxu0 0.0
        %606 = vmatprep.subr.mxu0 0.0
        %607 = vmatpush1.msra.mxu0 0.0
        %608 = vmatprep.subr.mxu0 0.0
        %609 = vmatpush1.msra.mxu0 0.0
        %610 = vmatprep.mubr.f32.mxu0 0.0
        %611 = vmatmul.mubr.f32.gmra.mrb[0].mxu0 %v538
        %v612 = vpop.f32.mrb[0].mxu0
        %v613 = vadd.f32 0.0, %v612
        %v614 = vpop.f32.mrb[0].mxu0
        %v615 = vadd.f32 0.0, %v614
        %616 = vdwg.mxu0
        %v617 = vadd.f32 %v513, %v613
        %v618 = vadd.f32 %v514, %v615
        %619 = vrot.lane.b32.xlu0 %v277, 1
        %v620 = vpop.permute.xlu0 %619
        %621 = vrot.lane.b32.xlu0 %v302, 1
        %v622 = vpop.permute.xlu0 %621
        %vm623 = vcmp.lt.s32.totalorder %v309, 1
        %v624 = vsel %vm623, %v620, %v622
        %v625 = vsel %vm623, %v622, %v620
        %v627 = vlaneseq
        %v628 = vshrl.u32 %v627, 7
        %v629 = vsub.s32 0, %v628
        %v630 = vrot.slane %v284, %v629
        %v631 = vlaneseq
        %v632 = vshrl.u32 %v631, 7
        %v633 = vsub.s32 1, %v632
        %v634 = vrot.slane %v284, %v633
        %v637 = vmul.f32 %v625, %v630
        %v638 = vmul.f32 %v624, %v634
        %s639 = scalar_lea.vmem %s1, 24
        %v640 = vld [vmem:[%s639] sm:$0xff]
        %v642 = vsel %vm327, %v640, 0
        %v645 = vsel %vm331, %v637, 0
        %v648 = vsel %vm331, %v638, 0
        %650 = vmatprep.subr.mxu0 %v648
        %651 = vmatpush1.msra.mxu0 %v645
        %652 = vmatprep.subr.mxu0 0.0
        %653 = vmatpush1.msra.mxu0 0.0
        %654 = vmatprep.subr.mxu0 0.0
        %655 = vmatpush1.msra.mxu0 0.0
        %656 = vmatprep.subr.mxu0 0.0
        %657 = vmatpush1.msra.mxu0 0.0
        %658 = vmatprep.subr.mxu0 0.0
        %659 = vmatpush1.msra.mxu0 0.0
        %660 = vmatprep.subr.mxu0 0.0
        %661 = vmatpush1.msra.mxu0 0.0
        %662 = vmatprep.subr.mxu0 0.0
        %663 = vmatpush1.msra.mxu0 0.0
        %664 = vmatprep.subr.mxu0 0.0
        %665 = vmatpush1.msra.mxu0 0.0
        %666 = vmatprep.subr.mxu0 0.0
        %667 = vmatpush1.msra.mxu0 0.0
        %668 = vmatprep.subr.mxu0 0.0
        %669 = vmatpush1.msra.mxu0 0.0
        %670 = vmatprep.subr.mxu0 0.0
        %671 = vmatpush1.msra.mxu0 0.0
        %672 = vmatprep.subr.mxu0 0.0
        %673 = vmatpush1.msra.mxu0 0.0
        %674 = vmatprep.subr.mxu0 0.0
        %675 = vmatpush1.msra.mxu0 0.0
        %676 = vmatprep.subr.mxu0 0.0
        %677 = vmatpush1.msra.mxu0 0.0
        %678 = vmatprep.subr.mxu0 0.0
        %679 = vmatpush1.msra.mxu0 0.0
        %680 = vmatprep.subr.mxu0 0.0
        %681 = vmatpush1.msra.mxu0 0.0
        %682 = vmatprep.subr.mxu0 0.0
        %683 = vmatpush1.msra.mxu0 0.0
        %684 = vmatprep.subr.mxu0 0.0
        %685 = vmatpush1.msra.mxu0 0.0
        %686 = vmatprep.subr.mxu0 0.0
        %687 = vmatpush1.msra.mxu0 0.0
        %688 = vmatprep.subr.mxu0 0.0
        %689 = vmatpush1.msra.mxu0 0.0
        %690 = vmatprep.subr.mxu0 0.0
        %691 = vmatpush1.msra.mxu0 0.0
        %692 = vmatprep.subr.mxu0 0.0
        %693 = vmatpush1.msra.mxu0 0.0
        %694 = vmatprep.subr.mxu0 0.0
        %695 = vmatpush1.msra.mxu0 0.0
        %696 = vmatprep.subr.mxu0 0.0
        %697 = vmatpush1.msra.mxu0 0.0
        %698 = vmatprep.subr.mxu0 0.0
        %699 = vmatpush1.msra.mxu0 0.0
        %700 = vmatprep.subr.mxu0 0.0
        %701 = vmatpush1.msra.mxu0 0.0
        %702 = vmatprep.subr.mxu0 0.0
        %703 = vmatpush1.msra.mxu0 0.0
        %704 = vmatprep.subr.mxu0 0.0
        %705 = vmatpush1.msra.mxu0 0.0
        %706 = vmatprep.subr.mxu0 0.0
        %707 = vmatpush1.msra.mxu0 0.0
        %708 = vmatprep.subr.mxu0 0.0
        %709 = vmatpush1.msra.mxu0 0.0
        %710 = vmatprep.subr.mxu0 0.0
        %711 = vmatpush1.msra.mxu0 0.0
        %712 = vmatprep.subr.mxu0 0.0
        %713 = vmatpush1.msra.mxu0 0.0
        %714 = vmatprep.mubr.f32.mxu0 0.0
        %715 = vmatmul.mubr.f32.gmra.mrb[0].mxu0 %v642
        %v716 = vpop.f32.mrb[0].mxu0
        %v717 = vadd.f32 0.0, %v716
        %v718 = vpop.f32.mrb[0].mxu0
        %v719 = vadd.f32 0.0, %v718
        %720 = vdwg.mxu0
        %v721 = vadd.f32 %v617, %v717
        %v722 = vadd.f32 %v618, %v719
        %v724 = vlaneseq
        %v725 = vshrl.u32 %v724, 7
        %v726 = vsub.s32 0, %v725
        %v727 = vrot.slane %v286, %v726
        %v728 = vlaneseq
        %v729 = vshrl.u32 %v728, 7
        %v730 = vsub.s32 1, %v729
        %v731 = vrot.slane %v286, %v730
        %v732 = vcombine.low %v727, %v731
        %v734 = vmul.f32 %v277, %v732
        %s735 = scalar_lea.vmem %s1, 32
        %v736 = vld [vmem:[%s735] sm:$0xff]
        %v738 = vcombine.high %v734, %v734
        %v740 = vsel %vm327, %v736, 0
        %v742 = vsel %vm331, %v734, 0
        %v744 = vsel %vm331, %v738, 0
        %746 = vmatprep.subr.mxu0 %v744
        %747 = vmatpush1.msra.mxu0 %v742
        %748 = vmatprep.subr.mxu0 0.0
        %749 = vmatpush1.msra.mxu0 0.0
        %750 = vmatprep.subr.mxu0 0.0
        %751 = vmatpush1.msra.mxu0 0.0
        %752 = vmatprep.subr.mxu0 0.0
        %753 = vmatpush1.msra.mxu0 0.0
        %754 = vmatprep.subr.mxu0 0.0
        %755 = vmatpush1.msra.mxu0 0.0
        %756 = vmatprep.subr.mxu0 0.0
        %757 = vmatpush1.msra.mxu0 0.0
        %758 = vmatprep.subr.mxu0 0.0
        %759 = vmatpush1.msra.mxu0 0.0
        %760 = vmatprep.subr.mxu0 0.0
        %761 = vmatpush1.msra.mxu0 0.0
        %762 = vmatprep.subr.mxu0 0.0
        %763 = vmatpush1.msra.mxu0 0.0
        %764 = vmatprep.subr.mxu0 0.0
        %765 = vmatpush1.msra.mxu0 0.0
        %766 = vmatprep.subr.mxu0 0.0
        %767 = vmatpush1.msra.mxu0 0.0
        %768 = vmatprep.subr.mxu0 0.0
        %769 = vmatpush1.msra.mxu0 0.0
        %770 = vmatprep.subr.mxu0 0.0
        %771 = vmatpush1.msra.mxu0 0.0
        %772 = vmatprep.subr.mxu0 0.0
        %773 = vmatpush1.msra.mxu0 0.0
        %774 = vmatprep.subr.mxu0 0.0
        %775 = vmatpush1.msra.mxu0 0.0
        %776 = vmatprep.subr.mxu0 0.0
        %777 = vmatpush1.msra.mxu0 0.0
        %778 = vmatprep.subr.mxu0 0.0
        %779 = vmatpush1.msra.mxu0 0.0
        %780 = vmatprep.subr.mxu0 0.0
        %781 = vmatpush1.msra.mxu0 0.0
        %782 = vmatprep.subr.mxu0 0.0
        %783 = vmatpush1.msra.mxu0 0.0
        %784 = vmatprep.subr.mxu0 0.0
        %785 = vmatpush1.msra.mxu0 0.0
        %786 = vmatprep.subr.mxu0 0.0
        %787 = vmatpush1.msra.mxu0 0.0
        %788 = vmatprep.subr.mxu0 0.0
        %789 = vmatpush1.msra.mxu0 0.0
        %790 = vmatprep.subr.mxu0 0.0
        %791 = vmatpush1.msra.mxu0 0.0
        %792 = vmatprep.subr.mxu0 0.0
        %793 = vmatpush1.msra.mxu0 0.0
        %794 = vmatprep.subr.mxu0 0.0
        %795 = vmatpush1.msra.mxu0 0.0
        %796 = vmatprep.subr.mxu0 0.0
        %797 = vmatpush1.msra.mxu0 0.0
        %798 = vmatprep.subr.mxu0 0.0
        %799 = vmatpush1.msra.mxu0 0.0
        %800 = vmatprep.subr.mxu0 0.0
        %801 = vmatpush1.msra.mxu0 0.0
        %802 = vmatprep.subr.mxu0 0.0
        %803 = vmatpush1.msra.mxu0 0.0
        %804 = vmatprep.subr.mxu0 0.0
        %805 = vmatpush1.msra.mxu0 0.0
        %806 = vmatprep.subr.mxu0 0.0
        %807 = vmatpush1.msra.mxu0 0.0
        %808 = vmatprep.subr.mxu0 0.0
        %809 = vmatpush1.msra.mxu0 0.0
        %810 = vmatprep.mubr.f32.mxu0 0.0
        %811 = vmatmul.mubr.f32.gmra.mrb[0].mxu0 %v740
        %v812 = vpop.f32.mrb[0].mxu0
        %v813 = vadd.f32 0.0, %v812
        %v814 = vpop.f32.mrb[0].mxu0
        %v815 = vadd.f32 0.0, %v814
        %816 = vdwg.mxu0
        %v817 = vadd.f32 %v721, %v813
        %v818 = vadd.f32 %v722, %v815
        %819 = vrot.lane.b32.xlu0 %v277, 127
        %v820 = vpop.permute.xlu0 %819
        %821 = vrot.lane.b32.xlu0 %v302, 127
        %v822 = vpop.permute.xlu0 %821
        %vm823 = vcmp.lt.s32.totalorder %v309, 127
        %v824 = vsel %vm823, %v820, %v822
        %v825 = vsel %vm823, %v822, %v820
        %v827 = vlaneseq
        %v828 = vshrl.u32 %v827, 7
        %v829 = vsub.s32 0, %v828
        %v830 = vrot.slane %v288, %v829
        %v831 = vlaneseq
        %v832 = vshrl.u32 %v831, 7
        %v833 = vsub.s32 1, %v832
        %v834 = vrot.slane %v288, %v833
        %v837 = vmul.f32 %v824, %v830
        %v838 = vmul.f32 %v825, %v834
        %s839 = scalar_lea.vmem %s1, 40
        %v840 = vld [vmem:[%s839] sm:$0xff]
        %v842 = vsel %vm327, %v840, 0
        %v845 = vsel %vm331, %v837, 0
        %v848 = vsel %vm331, %v838, 0
        %850 = vmatprep.subr.mxu0 %v848
        %851 = vmatpush1.msra.mxu0 %v845
        %852 = vmatprep.subr.mxu0 0.0
        %853 = vmatpush1.msra.mxu0 0.0
        %854 = vmatprep.subr.mxu0 0.0
        %855 = vmatpush1.msra.mxu0 0.0
        %856 = vmatprep.subr.mxu0 0.0
        %857 = vmatpush1.msra.mxu0 0.0
        %858 = vmatprep.subr.mxu0 0.0
        %859 = vmatpush1.msra.mxu0 0.0
        %860 = vmatprep.subr.mxu0 0.0
        %861 = vmatpush1.msra.mxu0 0.0
        %862 = vmatprep.subr.mxu0 0.0
        %863 = vmatpush1.msra.mxu0 0.0
        %864 = vmatprep.subr.mxu0 0.0
        %865 = vmatpush1.msra.mxu0 0.0
        %866 = vmatprep.subr.mxu0 0.0
        %867 = vmatpush1.msra.mxu0 0.0
        %868 = vmatprep.subr.mxu0 0.0
        %869 = vmatpush1.msra.mxu0 0.0
        %870 = vmatprep.subr.mxu0 0.0
        %871 = vmatpush1.msra.mxu0 0.0
        %872 = vmatprep.subr.mxu0 0.0
        %873 = vmatpush1.msra.mxu0 0.0
        %874 = vmatprep.subr.mxu0 0.0
        %875 = vmatpush1.msra.mxu0 0.0
        %876 = vmatprep.subr.mxu0 0.0
        %877 = vmatpush1.msra.mxu0 0.0
        %878 = vmatprep.subr.mxu0 0.0
        %879 = vmatpush1.msra.mxu0 0.0
        %880 = vmatprep.subr.mxu0 0.0
        %881 = vmatpush1.msra.mxu0 0.0
        %882 = vmatprep.subr.mxu0 0.0
        %883 = vmatpush1.msra.mxu0 0.0
        %884 = vmatprep.subr.mxu0 0.0
        %885 = vmatpush1.msra.mxu0 0.0
        %886 = vmatprep.subr.mxu0 0.0
        %887 = vmatpush1.msra.mxu0 0.0
        %888 = vmatprep.subr.mxu0 0.0
        %889 = vmatpush1.msra.mxu0 0.0
        %890 = vmatprep.subr.mxu0 0.0
        %891 = vmatpush1.msra.mxu0 0.0
        %892 = vmatprep.subr.mxu0 0.0
        %893 = vmatpush1.msra.mxu0 0.0
        %894 = vmatprep.subr.mxu0 0.0
        %895 = vmatpush1.msra.mxu0 0.0
        %896 = vmatprep.subr.mxu0 0.0
        %897 = vmatpush1.msra.mxu0 0.0
        %898 = vmatprep.subr.mxu0 0.0
        %899 = vmatpush1.msra.mxu0 0.0
        %900 = vmatprep.subr.mxu0 0.0
        %901 = vmatpush1.msra.mxu0 0.0
        %902 = vmatprep.subr.mxu0 0.0
        %903 = vmatpush1.msra.mxu0 0.0
        %904 = vmatprep.subr.mxu0 0.0
        %905 = vmatpush1.msra.mxu0 0.0
        %906 = vmatprep.subr.mxu0 0.0
        %907 = vmatpush1.msra.mxu0 0.0
        %908 = vmatprep.subr.mxu0 0.0
        %909 = vmatpush1.msra.mxu0 0.0
        %910 = vmatprep.subr.mxu0 0.0
        %911 = vmatpush1.msra.mxu0 0.0
        %912 = vmatprep.subr.mxu0 0.0
        %913 = vmatpush1.msra.mxu0 0.0
        %914 = vmatprep.mubr.f32.mxu0 0.0
        %915 = vmatmul.mubr.f32.gmra.mrb[0].mxu0 %v842
        %v916 = vpop.f32.mrb[0].mxu0
        %v917 = vadd.f32 0.0, %v916
        %v918 = vpop.f32.mrb[0].mxu0
        %v919 = vadd.f32 0.0, %v918
        %920 = vdwg.mxu0
        %v921 = vadd.f32 %v817, %v917
        %v922 = vadd.f32 %v818, %v919
        %923 = vrot.lane.b32.xlu0 %v277, 113
        %v924 = vpop.permute.xlu0 %923
        %925 = vrot.lane.b32.xlu0 %v302, 113
        %v926 = vpop.permute.xlu0 %925
        %vm927 = vcmp.lt.s32.totalorder %v309, 113
        %v928 = vsel %vm927, %v924, %v926
        %v929 = vsel %vm927, %v926, %v924
        %v931 = vlaneseq
        %v932 = vshrl.u32 %v931, 7
        %v933 = vsub.s32 0, %v932
        %v934 = vrot.slane %v290, %v933
        %v935 = vlaneseq
        %v936 = vshrl.u32 %v935, 7
        %v937 = vsub.s32 1, %v936
        %v938 = vrot.slane %v290, %v937
        %v941 = vmul.f32 %v928, %v934
        %v942 = vmul.f32 %v929, %v938
        %s943 = scalar_lea.vmem %s1, 48
        %v944 = vld [vmem:[%s943] sm:$0xff]
        %v946 = vsel %vm327, %v944, 0
        %v949 = vsel %vm331, %v941, 0
        %v952 = vsel %vm331, %v942, 0
        %954 = vmatprep.subr.mxu0 %v952
        %955 = vmatpush1.msra.mxu0 %v949
        %956 = vmatprep.subr.mxu0 0.0
        %957 = vmatpush1.msra.mxu0 0.0
        %958 = vmatprep.subr.mxu0 0.0
        %959 = vmatpush1.msra.mxu0 0.0
        %960 = vmatprep.subr.mxu0 0.0
        %961 = vmatpush1.msra.mxu0 0.0
        %962 = vmatprep.subr.mxu0 0.0
        %963 = vmatpush1.msra.mxu0 0.0
        %964 = vmatprep.subr.mxu0 0.0
        %965 = vmatpush1.msra.mxu0 0.0
        %966 = vmatprep.subr.mxu0 0.0
        %967 = vmatpush1.msra.mxu0 0.0
        %968 = vmatprep.subr.mxu0 0.0
        %969 = vmatpush1.msra.mxu0 0.0
        %970 = vmatprep.subr.mxu0 0.0
        %971 = vmatpush1.msra.mxu0 0.0
        %972 = vmatprep.subr.mxu0 0.0
        %973 = vmatpush1.msra.mxu0 0.0
        %974 = vmatprep.subr.mxu0 0.0
        %975 = vmatpush1.msra.mxu0 0.0
        %976 = vmatprep.subr.mxu0 0.0
        %977 = vmatpush1.msra.mxu0 0.0
        %978 = vmatprep.subr.mxu0 0.0
        %979 = vmatpush1.msra.mxu0 0.0
        %980 = vmatprep.subr.mxu0 0.0
        %981 = vmatpush1.msra.mxu0 0.0
        %982 = vmatprep.subr.mxu0 0.0
        %983 = vmatpush1.msra.mxu0 0.0
        %984 = vmatprep.subr.mxu0 0.0
        %985 = vmatpush1.msra.mxu0 0.0
        %986 = vmatprep.subr.mxu0 0.0
        %987 = vmatpush1.msra.mxu0 0.0
        %988 = vmatprep.subr.mxu0 0.0
        %989 = vmatpush1.msra.mxu0 0.0
        %990 = vmatprep.subr.mxu0 0.0
        %991 = vmatpush1.msra.mxu0 0.0
        %992 = vmatprep.subr.mxu0 0.0
        %993 = vmatpush1.msra.mxu0 0.0
        %994 = vmatprep.subr.mxu0 0.0
        %995 = vmatpush1.msra.mxu0 0.0
        %996 = vmatprep.subr.mxu0 0.0
        %997 = vmatpush1.msra.mxu0 0.0
        %998 = vmatprep.subr.mxu0 0.0
        %999 = vmatpush1.msra.mxu0 0.0
        %1000 = vmatprep.subr.mxu0 0.0
        %1001 = vmatpush1.msra.mxu0 0.0
        %1002 = vmatprep.subr.mxu0 0.0
        %1003 = vmatpush1.msra.mxu0 0.0
        %1004 = vmatprep.subr.mxu0 0.0
        %1005 = vmatpush1.msra.mxu0 0.0
        %1006 = vmatprep.subr.mxu0 0.0
        %1007 = vmatpush1.msra.mxu0 0.0
        %1008 = vmatprep.subr.mxu0 0.0
        %1009 = vmatpush1.msra.mxu0 0.0
        %1010 = vmatprep.subr.mxu0 0.0
        %1011 = vmatpush1.msra.mxu0 0.0
        %1012 = vmatprep.subr.mxu0 0.0
        %1013 = vmatpush1.msra.mxu0 0.0
        %1014 = vmatprep.subr.mxu0 0.0
        %1015 = vmatpush1.msra.mxu0 0.0
        %1016 = vmatprep.subr.mxu0 0.0
        %1017 = vmatpush1.msra.mxu0 0.0
        %1018 = vmatprep.mubr.f32.mxu0 0.0
        %1019 = vmatmul.mubr.f32.gmra.mrb[0].mxu0 %v946
        %v1020 = vpop.f32.mrb[0].mxu0
        %v1021 = vadd.f32 0.0, %v1020
        %v1022 = vpop.f32.mrb[0].mxu0
        %v1023 = vadd.f32 0.0, %v1022
        %1024 = vdwg.mxu0
        %v1025 = vadd.f32 %v921, %v1021
        %v1026 = vadd.f32 %v922, %v1023
        %1027 = vrot.lane.b32.xlu0 %v277, 112
        %v1028 = vpop.permute.xlu0 %1027
        %1029 = vrot.lane.b32.xlu0 %v302, 112
        %v1030 = vpop.permute.xlu0 %1029
        %vm1031 = vcmp.lt.s32.totalorder %v309, 112
        %v1032 = vsel %vm1031, %v1028, %v1030
        %v1033 = vsel %vm1031, %v1030, %v1028
        %v1035 = vlaneseq
        %v1036 = vshrl.u32 %v1035, 7
        %v1037 = vsub.s32 0, %v1036
        %v1038 = vrot.slane %v292, %v1037
        %v1039 = vlaneseq
        %v1040 = vshrl.u32 %v1039, 7
        %v1041 = vsub.s32 1, %v1040
        %v1042 = vrot.slane %v292, %v1041
        %v1045 = vmul.f32 %v1032, %v1038
        %v1046 = vmul.f32 %v1033, %v1042
        %s1047 = scalar_lea.vmem %s1, 56
        %v1048 = vld [vmem:[%s1047] sm:$0xff]
        %v1050 = vsel %vm327, %v1048, 0
        %v1053 = vsel %vm331, %v1045, 0
        %v1056 = vsel %vm331, %v1046, 0
        %1058 = vmatprep.subr.mxu0 %v1056
        %1059 = vmatpush1.msra.mxu0 %v1053
        %1060 = vmatprep.subr.mxu0 0.0
        %1061 = vmatpush1.msra.mxu0 0.0
        %1062 = vmatprep.subr.mxu0 0.0
        %1063 = vmatpush1.msra.mxu0 0.0
        %1064 = vmatprep.subr.mxu0 0.0
        %1065 = vmatpush1.msra.mxu0 0.0
        %1066 = vmatprep.subr.mxu0 0.0
        %1067 = vmatpush1.msra.mxu0 0.0
        %1068 = vmatprep.subr.mxu0 0.0
        %1069 = vmatpush1.msra.mxu0 0.0
        %1070 = vmatprep.subr.mxu0 0.0
        %1071 = vmatpush1.msra.mxu0 0.0
        %1072 = vmatprep.subr.mxu0 0.0
        %1073 = vmatpush1.msra.mxu0 0.0
        %1074 = vmatprep.subr.mxu0 0.0
        %1075 = vmatpush1.msra.mxu0 0.0
        %1076 = vmatprep.subr.mxu0 0.0
        %1077 = vmatpush1.msra.mxu0 0.0
        %1078 = vmatprep.subr.mxu0 0.0
        %1079 = vmatpush1.msra.mxu0 0.0
        %1080 = vmatprep.subr.mxu0 0.0
        %1081 = vmatpush1.msra.mxu0 0.0
        %1082 = vmatprep.subr.mxu0 0.0
        %1083 = vmatpush1.msra.mxu0 0.0
        %1084 = vmatprep.subr.mxu0 0.0
        %1085 = vmatpush1.msra.mxu0 0.0
        %1086 = vmatprep.subr.mxu0 0.0
        %1087 = vmatpush1.msra.mxu0 0.0
        %1088 = vmatprep.subr.mxu0 0.0
        %1089 = vmatpush1.msra.mxu0 0.0
        %1090 = vmatprep.subr.mxu0 0.0
        %1091 = vmatpush1.msra.mxu0 0.0
        %1092 = vmatprep.subr.mxu0 0.0
        %1093 = vmatpush1.msra.mxu0 0.0
        %1094 = vmatprep.subr.mxu0 0.0
        %1095 = vmatpush1.msra.mxu0 0.0
        %1096 = vmatprep.subr.mxu0 0.0
        %1097 = vmatpush1.msra.mxu0 0.0
        %1098 = vmatprep.subr.mxu0 0.0
        %1099 = vmatpush1.msra.mxu0 0.0
        %1100 = vmatprep.subr.mxu0 0.0
        %1101 = vmatpush1.msra.mxu0 0.0
        %1102 = vmatprep.subr.mxu0 0.0
        %1103 = vmatpush1.msra.mxu0 0.0
        %1104 = vmatprep.subr.mxu0 0.0
        %1105 = vmatpush1.msra.mxu0 0.0
        %1106 = vmatprep.subr.mxu0 0.0
        %1107 = vmatpush1.msra.mxu0 0.0
        %1108 = vmatprep.subr.mxu0 0.0
        %1109 = vmatpush1.msra.mxu0 0.0
        %1110 = vmatprep.subr.mxu0 0.0
        %1111 = vmatpush1.msra.mxu0 0.0
        %1112 = vmatprep.subr.mxu0 0.0
        %1113 = vmatpush1.msra.mxu0 0.0
        %1114 = vmatprep.subr.mxu0 0.0
        %1115 = vmatpush1.msra.mxu0 0.0
        %1116 = vmatprep.subr.mxu0 0.0
        %1117 = vmatpush1.msra.mxu0 0.0
        %1118 = vmatprep.subr.mxu0 0.0
        %1119 = vmatpush1.msra.mxu0 0.0
        %1120 = vmatprep.subr.mxu0 0.0
        %1121 = vmatpush1.msra.mxu0 0.0
        %1122 = vmatprep.mubr.f32.mxu0 0.0
        %1123 = vmatmul.mubr.f32.gmra.mrb[0].mxu0 %v1050
        %v1124 = vpop.f32.mrb[0].mxu0
        %v1125 = vadd.f32 0.0, %v1124
        %v1126 = vpop.f32.mrb[0].mxu0
        %v1127 = vadd.f32 0.0, %v1126
        %1128 = vdwg.mxu0
        %v1129 = vadd.f32 %v1025, %v1125
        %v1130 = vadd.f32 %v1026, %v1127
        %1131 = vrot.lane.b32.xlu0 %v277, 111
        %v1132 = vpop.permute.xlu0 %1131
        %1133 = vrot.lane.b32.xlu0 %v302, 111
        %v1134 = vpop.permute.xlu0 %1133
        %vm1135 = vcmp.lt.s32.totalorder %v309, 111
        %v1136 = vsel %vm1135, %v1132, %v1134
        %v1137 = vsel %vm1135, %v1134, %v1132
        %v1139 = vlaneseq
        %v1140 = vshrl.u32 %v1139, 7
        %v1141 = vsub.s32 0, %v1140
        %v1142 = vrot.slane %v294, %v1141
        %v1143 = vlaneseq
        %v1144 = vshrl.u32 %v1143, 7
        %v1145 = vsub.s32 1, %v1144
        %v1146 = vrot.slane %v294, %v1145
        %v1149 = vmul.f32 %v1136, %v1142
        %v1150 = vmul.f32 %v1137, %v1146
        %s1151 = scalar_lea.vmem %s1, 64
        %v1152 = vld [vmem:[%s1151] sm:$0xff]
        %v1154 = vsel %vm327, %v1152, 0
        %v1157 = vsel %vm331, %v1149, 0
        %v1160 = vsel %vm331, %v1150, 0
        %1162 = vmatprep.subr.mxu0 %v1160
        %1163 = vmatpush1.msra.mxu0 %v1157
        %1164 = vmatprep.subr.mxu0 0.0
        %1165 = vmatpush1.msra.mxu0 0.0
        %1166 = vmatprep.subr.mxu0 0.0
        %1167 = vmatpush1.msra.mxu0 0.0
        %1168 = vmatprep.subr.mxu0 0.0
        %1169 = vmatpush1.msra.mxu0 0.0
        %1170 = vmatprep.subr.mxu0 0.0
        %1171 = vmatpush1.msra.mxu0 0.0
        %1172 = vmatprep.subr.mxu0 0.0
        %1173 = vmatpush1.msra.mxu0 0.0
        %1174 = vmatprep.subr.mxu0 0.0
        %1175 = vmatpush1.msra.mxu0 0.0
        %1176 = vmatprep.subr.mxu0 0.0
        %1177 = vmatpush1.msra.mxu0 0.0
        %1178 = vmatprep.subr.mxu0 0.0
        %1179 = vmatpush1.msra.mxu0 0.0
        %1180 = vmatprep.subr.mxu0 0.0
        %1181 = vmatpush1.msra.mxu0 0.0
        %1182 = vmatprep.subr.mxu0 0.0
        %1183 = vmatpush1.msra.mxu0 0.0
        %1184 = vmatprep.subr.mxu0 0.0
        %1185 = vmatpush1.msra.mxu0 0.0
        %1186 = vmatprep.subr.mxu0 0.0
        %1187 = vmatpush1.msra.mxu0 0.0
        %1188 = vmatprep.subr.mxu0 0.0
        %1189 = vmatpush1.msra.mxu0 0.0
        %1190 = vmatprep.subr.mxu0 0.0
        %1191 = vmatpush1.msra.mxu0 0.0
        %1192 = vmatprep.subr.mxu0 0.0
        %1193 = vmatpush1.msra.mxu0 0.0
        %1194 = vmatprep.subr.mxu0 0.0
        %1195 = vmatpush1.msra.mxu0 0.0
        %1196 = vmatprep.subr.mxu0 0.0
        %1197 = vmatpush1.msra.mxu0 0.0
        %1198 = vmatprep.subr.mxu0 0.0
        %1199 = vmatpush1.msra.mxu0 0.0
        %1200 = vmatprep.subr.mxu0 0.0
        %1201 = vmatpush1.msra.mxu0 0.0
        %1202 = vmatprep.subr.mxu0 0.0
        %1203 = vmatpush1.msra.mxu0 0.0
        %1204 = vmatprep.subr.mxu0 0.0
        %1205 = vmatpush1.msra.mxu0 0.0
        %1206 = vmatprep.subr.mxu0 0.0
        %1207 = vmatpush1.msra.mxu0 0.0
        %1208 = vmatprep.subr.mxu0 0.0
        %1209 = vmatpush1.msra.mxu0 0.0
        %1210 = vmatprep.subr.mxu0 0.0
        %1211 = vmatpush1.msra.mxu0 0.0
        %1212 = vmatprep.subr.mxu0 0.0
        %1213 = vmatpush1.msra.mxu0 0.0
        %1214 = vmatprep.subr.mxu0 0.0
        %1215 = vmatpush1.msra.mxu0 0.0
        %1216 = vmatprep.subr.mxu0 0.0
        %1217 = vmatpush1.msra.mxu0 0.0
        %1218 = vmatprep.subr.mxu0 0.0
        %1219 = vmatpush1.msra.mxu0 0.0
        %1220 = vmatprep.subr.mxu0 0.0
        %1221 = vmatpush1.msra.mxu0 0.0
        %1222 = vmatprep.subr.mxu0 0.0
        %1223 = vmatpush1.msra.mxu0 0.0
        %1224 = vmatprep.subr.mxu0 0.0
        %1225 = vmatpush1.msra.mxu0 0.0
        %1226 = vmatprep.mubr.f32.mxu0 0.0
        %1227 = vmatmul.mubr.f32.gmra.mrb[0].mxu0 %v1154
        %v1228 = vpop.f32.mrb[0].mxu0
        %v1229 = vadd.f32 0.0, %v1228
        %v1230 = vpop.f32.mrb[0].mxu0
        %v1231 = vadd.f32 0.0, %v1230
        %1232 = vdwg.mxu0
        %v1233 = vadd.f32 %v1129, %v1229
        %v1234 = vadd.f32 %v1130, %v1231
        %v1235 = vmax.f32 %v1233, 0.0
        %v1236 = vmax.f32 %v1234, 0.0
        %v1237 = vld [vmem:[%s4] sm:$0xff]
        %1239 = vset.pattern.permute.xlu0 0
        %1240 = vperm.xlu0 %1239, %v1237
        %v1241 = vpop.permute.xlu0 %1240
        %1243 = vrot.lane.b32.xlu0 %v1235, 17
        %v1244 = vpop.permute.xlu0 %1243
        %1245 = vrot.lane.b32.xlu0 %v1236, 17
        %v1246 = vpop.permute.xlu0 %1245
        %v1247 = vsel %vm310, %v1244, %v1246
        %v1248 = vsel %vm310, %v1246, %v1244
        %v1249 = vmul.f32 %v1248, %v317
        %v1250 = vmul.f32 %v1247, %v321
        %v1251 = vld [vmem:[%s3] sm:$0xff]
        %vm1252 = vcmask 64512
        %v1254 = vsel %vm1252, %v1251, 0
        %1256 = vmatprep.subr.mxu0 %v1250
        %1257 = vmatpush1.msra.mxu0 %v1249
        %1258 = vmatprep.subr.mxu0 0.0
        %1259 = vmatpush1.msra.mxu0 0.0
        %1260 = vmatprep.subr.mxu0 0.0
        %1261 = vmatpush1.msra.mxu0 0.0
        %1262 = vmatprep.subr.mxu0 0.0
        %1263 = vmatpush1.msra.mxu0 0.0
        %1264 = vmatprep.subr.mxu0 0.0
        %1265 = vmatpush1.msra.mxu0 0.0
        %1266 = vmatprep.subr.mxu0 0.0
        %1267 = vmatpush1.msra.mxu0 0.0
        %1268 = vmatprep.subr.mxu0 0.0
        %1269 = vmatpush1.msra.mxu0 0.0
        %1270 = vmatprep.subr.mxu0 0.0
        %1271 = vmatpush1.msra.mxu0 0.0
        %1272 = vmatprep.subr.mxu0 0.0
        %1273 = vmatpush1.msra.mxu0 0.0
        %1274 = vmatprep.subr.mxu0 0.0
        %1275 = vmatpush1.msra.mxu0 0.0
        %1276 = vmatprep.subr.mxu0 0.0
        %1277 = vmatpush1.msra.mxu0 0.0
        %1278 = vmatprep.subr.mxu0 0.0
        %1279 = vmatpush1.msra.mxu0 0.0
        %1280 = vmatprep.subr.mxu0 0.0
        %1281 = vmatpush1.msra.mxu0 0.0
        %1282 = vmatprep.subr.mxu0 0.0
        %1283 = vmatpush1.msra.mxu0 0.0
        %1284 = vmatprep.subr.mxu0 0.0
        %1285 = vmatpush1.msra.mxu0 0.0
        %1286 = vmatprep.subr.mxu0 0.0
        %1287 = vmatpush1.msra.mxu0 0.0
        %1288 = vmatprep.subr.mxu0 0.0
        %1289 = vmatpush1.msra.mxu0 0.0
        %1290 = vmatprep.subr.mxu0 0.0
        %1291 = vmatpush1.msra.mxu0 0.0
        %1292 = vmatprep.subr.mxu0 0.0
        %1293 = vmatpush1.msra.mxu0 0.0
        %1294 = vmatprep.subr.mxu0 0.0
        %1295 = vmatpush1.msra.mxu0 0.0
        %1296 = vmatprep.subr.mxu0 0.0
        %1297 = vmatpush1.msra.mxu0 0.0
        %1298 = vmatprep.subr.mxu0 0.0
        %1299 = vmatpush1.msra.mxu0 0.0
        %1300 = vmatprep.subr.mxu0 0.0
        %1301 = vmatpush1.msra.mxu0 0.0
        %1302 = vmatprep.subr.mxu0 0.0
        %1303 = vmatpush1.msra.mxu0 0.0
        %1304 = vmatprep.subr.mxu0 0.0
        %1305 = vmatpush1.msra.mxu0 0.0
        %1306 = vmatprep.subr.mxu0 0.0
        %1307 = vmatpush1.msra.mxu0 0.0
        %1308 = vmatprep.subr.mxu0 0.0
        %1309 = vmatpush1.msra.mxu0 0.0
        %1310 = vmatprep.subr.mxu0 0.0
        %1311 = vmatpush1.msra.mxu0 0.0
        %1312 = vmatprep.subr.mxu0 0.0
        %1313 = vmatpush1.msra.mxu0 0.0
        %1314 = vmatprep.subr.mxu0 0.0
        %1315 = vmatpush1.msra.mxu0 0.0
        %1316 = vmatprep.subr.mxu0 0.0
        %1317 = vmatpush1.msra.mxu0 0.0
        %1318 = vmatprep.subr.mxu0 0.0
        %1319 = vmatpush1.msra.mxu0 0.0
        %1320 = vmatprep.mubr.f32.mxu0 0.0
        %1321 = vmatmul.mubr.f32.gmra.mrb[0].mxu0 %v1254
        %v1322 = vpop.f32.mrb[0].mxu0
        %v1323 = vadd.f32 0.0, %v1322
        %v1324 = vpop.f32.mrb[0].mxu0
        %v1325 = vadd.f32 0.0, %v1324
        %1326 = vdwg.mxu0
        %v1327 = vadd.f32 %v1241, %v1323
        %v1328 = vadd.f32 %v1241, %v1325
        %1329 = vrot.lane.b32.xlu0 %v1235, 16
        %v1330 = vpop.permute.xlu0 %1329
        %1331 = vrot.lane.b32.xlu0 %v1236, 16
        %v1332 = vpop.permute.xlu0 %1331
        %v1333 = vsel %vm415, %v1330, %v1332
        %v1334 = vsel %vm415, %v1332, %v1330
        %v1335 = vmul.f32 %v1334, %v422
        %v1336 = vmul.f32 %v1333, %v426
        %s1337 = scalar_lea.vmem %s3, 8
        %v1338 = vld [vmem:[%s1337] sm:$0xff]
        %v1340 = vsel %vm1252, %v1338, 0
        %1342 = vmatprep.subr.mxu0 %v1336
        %1343 = vmatpush1.msra.mxu0 %v1335
        %1344 = vmatprep.subr.mxu0 0.0
        %1345 = vmatpush1.msra.mxu0 0.0
        %1346 = vmatprep.subr.mxu0 0.0
        %1347 = vmatpush1.msra.mxu0 0.0
        %1348 = vmatprep.subr.mxu0 0.0
        %1349 = vmatpush1.msra.mxu0 0.0
        %1350 = vmatprep.subr.mxu0 0.0
        %1351 = vmatpush1.msra.mxu0 0.0
        %1352 = vmatprep.subr.mxu0 0.0
        %1353 = vmatpush1.msra.mxu0 0.0
        %1354 = vmatprep.subr.mxu0 0.0
        %1355 = vmatpush1.msra.mxu0 0.0
        %1356 = vmatprep.subr.mxu0 0.0
        %1357 = vmatpush1.msra.mxu0 0.0
        %1358 = vmatprep.subr.mxu0 0.0
        %1359 = vmatpush1.msra.mxu0 0.0
        %1360 = vmatprep.subr.mxu0 0.0
        %1361 = vmatpush1.msra.mxu0 0.0
        %1362 = vmatprep.subr.mxu0 0.0
        %1363 = vmatpush1.msra.mxu0 0.0
        %1364 = vmatprep.subr.mxu0 0.0
        %1365 = vmatpush1.msra.mxu0 0.0
        %1366 = vmatprep.subr.mxu0 0.0
        %1367 = vmatpush1.msra.mxu0 0.0
        %1368 = vmatprep.subr.mxu0 0.0
        %1369 = vmatpush1.msra.mxu0 0.0
        %1370 = vmatprep.subr.mxu0 0.0
        %1371 = vmatpush1.msra.mxu0 0.0
        %1372 = vmatprep.subr.mxu0 0.0
        %1373 = vmatpush1.msra.mxu0 0.0
        %1374 = vmatprep.subr.mxu0 0.0
        %1375 = vmatpush1.msra.mxu0 0.0
        %1376 = vmatprep.subr.mxu0 0.0
        %1377 = vmatpush1.msra.mxu0 0.0
        %1378 = vmatprep.subr.mxu0 0.0
        %1379 = vmatpush1.msra.mxu0 0.0
        %1380 = vmatprep.subr.mxu0 0.0
        %1381 = vmatpush1.msra.mxu0 0.0
        %1382 = vmatprep.subr.mxu0 0.0
        %1383 = vmatpush1.msra.mxu0 0.0
        %1384 = vmatprep.subr.mxu0 0.0
        %1385 = vmatpush1.msra.mxu0 0.0
        %1386 = vmatprep.subr.mxu0 0.0
        %1387 = vmatpush1.msra.mxu0 0.0
        %1388 = vmatprep.subr.mxu0 0.0
        %1389 = vmatpush1.msra.mxu0 0.0
        %1390 = vmatprep.subr.mxu0 0.0
        %1391 = vmatpush1.msra.mxu0 0.0
        %1392 = vmatprep.subr.mxu0 0.0
        %1393 = vmatpush1.msra.mxu0 0.0
        %1394 = vmatprep.subr.mxu0 0.0
        %1395 = vmatpush1.msra.mxu0 0.0
        %1396 = vmatprep.subr.mxu0 0.0
        %1397 = vmatpush1.msra.mxu0 0.0
        %1398 = vmatprep.subr.mxu0 0.0
        %1399 = vmatpush1.msra.mxu0 0.0
        %1400 = vmatprep.subr.mxu0 0.0
        %1401 = vmatpush1.msra.mxu0 0.0
        %1402 = vmatprep.subr.mxu0 0.0
        %1403 = vmatpush1.msra.mxu0 0.0
        %1404 = vmatprep.subr.mxu0 0.0
        %1405 = vmatpush1.msra.mxu0 0.0
        %1406 = vmatprep.mubr.f32.mxu0 0.0
        %1407 = vmatmul.mubr.f32.gmra.mrb[0].mxu0 %v1340
        %v1408 = vpop.f32.mrb[0].mxu0
        %v1409 = vadd.f32 0.0, %v1408
        %v1410 = vpop.f32.mrb[0].mxu0
        %v1411 = vadd.f32 0.0, %v1410
        %1412 = vdwg.mxu0
        %v1413 = vadd.f32 %v1327, %v1409
        %v1414 = vadd.f32 %v1328, %v1411
        %1415 = vrot.lane.b32.xlu0 %v1235, 15
        %v1416 = vpop.permute.xlu0 %1415
        %1417 = vrot.lane.b32.xlu0 %v1236, 15
        %v1418 = vpop.permute.xlu0 %1417
        %v1419 = vsel %vm519, %v1416, %v1418
        %v1420 = vsel %vm519, %v1418, %v1416
        %v1421 = vmul.f32 %v1420, %v526
        %v1422 = vmul.f32 %v1419, %v530
        %s1423 = scalar_lea.vmem %s3, 16
        %v1424 = vld [vmem:[%s1423] sm:$0xff]
        %v1426 = vsel %vm1252, %v1424, 0
        %1428 = vmatprep.subr.mxu0 %v1422
        %1429 = vmatpush1.msra.mxu0 %v1421
        %1430 = vmatprep.subr.mxu0 0.0
        %1431 = vmatpush1.msra.mxu0 0.0
        %1432 = vmatprep.subr.mxu0 0.0
        %1433 = vmatpush1.msra.mxu0 0.0
        %1434 = vmatprep.subr.mxu0 0.0
        %1435 = vmatpush1.msra.mxu0 0.0
        %1436 = vmatprep.subr.mxu0 0.0
        %1437 = vmatpush1.msra.mxu0 0.0
        %1438 = vmatprep.subr.mxu0 0.0
        %1439 = vmatpush1.msra.mxu0 0.0
        %1440 = vmatprep.subr.mxu0 0.0
        %1441 = vmatpush1.msra.mxu0 0.0
        %1442 = vmatprep.subr.mxu0 0.0
        %1443 = vmatpush1.msra.mxu0 0.0
        %1444 = vmatprep.subr.mxu0 0.0
        %1445 = vmatpush1.msra.mxu0 0.0
        %1446 = vmatprep.subr.mxu0 0.0
        %1447 = vmatpush1.msra.mxu0 0.0
        %1448 = vmatprep.subr.mxu0 0.0
        %1449 = vmatpush1.msra.mxu0 0.0
        %1450 = vmatprep.subr.mxu0 0.0
        %1451 = vmatpush1.msra.mxu0 0.0
        %1452 = vmatprep.subr.mxu0 0.0
        %1453 = vmatpush1.msra.mxu0 0.0
        %1454 = vmatprep.subr.mxu0 0.0
        %1455 = vmatpush1.msra.mxu0 0.0
        %1456 = vmatprep.subr.mxu0 0.0
        %1457 = vmatpush1.msra.mxu0 0.0
        %1458 = vmatprep.subr.mxu0 0.0
        %1459 = vmatpush1.msra.mxu0 0.0
        %1460 = vmatprep.subr.mxu0 0.0
        %1461 = vmatpush1.msra.mxu0 0.0
        %1462 = vmatprep.subr.mxu0 0.0
        %1463 = vmatpush1.msra.mxu0 0.0
        %1464 = vmatprep.subr.mxu0 0.0
        %1465 = vmatpush1.msra.mxu0 0.0
        %1466 = vmatprep.subr.mxu0 0.0
        %1467 = vmatpush1.msra.mxu0 0.0
        %1468 = vmatprep.subr.mxu0 0.0
        %1469 = vmatpush1.msra.mxu0 0.0
        %1470 = vmatprep.subr.mxu0 0.0
        %1471 = vmatpush1.msra.mxu0 0.0
        %1472 = vmatprep.subr.mxu0 0.0
        %1473 = vmatpush1.msra.mxu0 0.0
        %1474 = vmatprep.subr.mxu0 0.0
        %1475 = vmatpush1.msra.mxu0 0.0
        %1476 = vmatprep.subr.mxu0 0.0
        %1477 = vmatpush1.msra.mxu0 0.0
        %1478 = vmatprep.subr.mxu0 0.0
        %1479 = vmatpush1.msra.mxu0 0.0
        %1480 = vmatprep.subr.mxu0 0.0
        %1481 = vmatpush1.msra.mxu0 0.0
        %1482 = vmatprep.subr.mxu0 0.0
        %1483 = vmatpush1.msra.mxu0 0.0
        %1484 = vmatprep.subr.mxu0 0.0
        %1485 = vmatpush1.msra.mxu0 0.0
        %1486 = vmatprep.subr.mxu0 0.0
        %1487 = vmatpush1.msra.mxu0 0.0
        %1488 = vmatprep.subr.mxu0 0.0
        %1489 = vmatpush1.msra.mxu0 0.0
        %1490 = vmatprep.subr.mxu0 0.0
        %1491 = vmatpush1.msra.mxu0 0.0
        %1492 = vmatprep.mubr.f32.mxu0 0.0
        %1493 = vmatmul.mubr.f32.gmra.mrb[0].mxu0 %v1426
        %v1494 = vpop.f32.mrb[0].mxu0
        %v1495 = vadd.f32 0.0, %v1494
        %v1496 = vpop.f32.mrb[0].mxu0
        %v1497 = vadd.f32 0.0, %v1496
        %1498 = vdwg.mxu0
        %v1499 = vadd.f32 %v1413, %v1495
        %v1500 = vadd.f32 %v1414, %v1497
        %1501 = vrot.lane.b32.xlu0 %v1235, 1
        %v1502 = vpop.permute.xlu0 %1501
        %1503 = vrot.lane.b32.xlu0 %v1236, 1
        %v1504 = vpop.permute.xlu0 %1503
        %v1505 = vsel %vm623, %v1502, %v1504
        %v1506 = vsel %vm623, %v1504, %v1502
        %v1507 = vmul.f32 %v1506, %v630
        %v1508 = vmul.f32 %v1505, %v634
        %s1509 = scalar_lea.vmem %s3, 24
        %v1510 = vld [vmem:[%s1509] sm:$0xff]
        %v1512 = vsel %vm1252, %v1510, 0
        %1514 = vmatprep.subr.mxu0 %v1508
        %1515 = vmatpush1.msra.mxu0 %v1507
        %1516 = vmatprep.subr.mxu0 0.0
        %1517 = vmatpush1.msra.mxu0 0.0
        %1518 = vmatprep.subr.mxu0 0.0
        %1519 = vmatpush1.msra.mxu0 0.0
        %1520 = vmatprep.subr.mxu0 0.0
        %1521 = vmatpush1.msra.mxu0 0.0
        %1522 = vmatprep.subr.mxu0 0.0
        %1523 = vmatpush1.msra.mxu0 0.0
        %1524 = vmatprep.subr.mxu0 0.0
        %1525 = vmatpush1.msra.mxu0 0.0
        %1526 = vmatprep.subr.mxu0 0.0
        %1527 = vmatpush1.msra.mxu0 0.0
        %1528 = vmatprep.subr.mxu0 0.0
        %1529 = vmatpush1.msra.mxu0 0.0
        %1530 = vmatprep.subr.mxu0 0.0
        %1531 = vmatpush1.msra.mxu0 0.0
        %1532 = vmatprep.subr.mxu0 0.0
        %1533 = vmatpush1.msra.mxu0 0.0
        %1534 = vmatprep.subr.mxu0 0.0
        %1535 = vmatpush1.msra.mxu0 0.0
        %1536 = vmatprep.subr.mxu0 0.0
        %1537 = vmatpush1.msra.mxu0 0.0
        %1538 = vmatprep.subr.mxu0 0.0
        %1539 = vmatpush1.msra.mxu0 0.0
        %1540 = vmatprep.subr.mxu0 0.0
        %1541 = vmatpush1.msra.mxu0 0.0
        %1542 = vmatprep.subr.mxu0 0.0
        %1543 = vmatpush1.msra.mxu0 0.0
        %1544 = vmatprep.subr.mxu0 0.0
        %1545 = vmatpush1.msra.mxu0 0.0
        %1546 = vmatprep.subr.mxu0 0.0
        %1547 = vmatpush1.msra.mxu0 0.0
        %1548 = vmatprep.subr.mxu0 0.0
        %1549 = vmatpush1.msra.mxu0 0.0
        %1550 = vmatprep.subr.mxu0 0.0
        %1551 = vmatpush1.msra.mxu0 0.0
        %1552 = vmatprep.subr.mxu0 0.0
        %1553 = vmatpush1.msra.mxu0 0.0
        %1554 = vmatprep.subr.mxu0 0.0
        %1555 = vmatpush1.msra.mxu0 0.0
        %1556 = vmatprep.subr.mxu0 0.0
        %1557 = vmatpush1.msra.mxu0 0.0
        %1558 = vmatprep.subr.mxu0 0.0
        %1559 = vmatpush1.msra.mxu0 0.0
        %1560 = vmatprep.subr.mxu0 0.0
        %1561 = vmatpush1.msra.mxu0 0.0
        %1562 = vmatprep.subr.mxu0 0.0
        %1563 = vmatpush1.msra.mxu0 0.0
        %1564 = vmatprep.subr.mxu0 0.0
        %1565 = vmatpush1.msra.mxu0 0.0
        %1566 = vmatprep.subr.mxu0 0.0
        %1567 = vmatpush1.msra.mxu0 0.0
        %1568 = vmatprep.subr.mxu0 0.0
        %1569 = vmatpush1.msra.mxu0 0.0
        %1570 = vmatprep.subr.mxu0 0.0
        %1571 = vmatpush1.msra.mxu0 0.0
        %1572 = vmatprep.subr.mxu0 0.0
        %1573 = vmatpush1.msra.mxu0 0.0
        %1574 = vmatprep.subr.mxu0 0.0
        %1575 = vmatpush1.msra.mxu0 0.0
        %1576 = vmatprep.subr.mxu0 0.0
        %1577 = vmatpush1.msra.mxu0 0.0
        %1578 = vmatprep.mubr.f32.mxu0 0.0
        %1579 = vmatmul.mubr.f32.gmra.mrb[0].mxu0 %v1512
        %v1580 = vpop.f32.mrb[0].mxu0
        %v1581 = vadd.f32 0.0, %v1580
        %v1582 = vpop.f32.mrb[0].mxu0
        %v1583 = vadd.f32 0.0, %v1582
        %1584 = vdwg.mxu0
        %v1585 = vadd.f32 %v1499, %v1581
        %v1586 = vadd.f32 %v1500, %v1583
        %v1589 = vmul.f32 %v1235, %v727
        %v1590 = vmul.f32 %v1236, %v731
        %s1591 = scalar_lea.vmem %s3, 32
        %v1592 = vld [vmem:[%s1591] sm:$0xff]
        %v1594 = vsel %vm1252, %v1592, 0
        %1596 = vmatprep.subr.mxu0 %v1590
        %1597 = vmatpush1.msra.mxu0 %v1589
        %1598 = vmatprep.subr.mxu0 0.0
        %1599 = vmatpush1.msra.mxu0 0.0
        %1600 = vmatprep.subr.mxu0 0.0
        %1601 = vmatpush1.msra.mxu0 0.0
        %1602 = vmatprep.subr.mxu0 0.0
        %1603 = vmatpush1.msra.mxu0 0.0
        %1604 = vmatprep.subr.mxu0 0.0
        %1605 = vmatpush1.msra.mxu0 0.0
        %1606 = vmatprep.subr.mxu0 0.0
        %1607 = vmatpush1.msra.mxu0 0.0
        %1608 = vmatprep.subr.mxu0 0.0
        %1609 = vmatpush1.msra.mxu0 0.0
        %1610 = vmatprep.subr.mxu0 0.0
        %1611 = vmatpush1.msra.mxu0 0.0
        %1612 = vmatprep.subr.mxu0 0.0
        %1613 = vmatpush1.msra.mxu0 0.0
        %1614 = vmatprep.subr.mxu0 0.0
        %1615 = vmatpush1.msra.mxu0 0.0
        %1616 = vmatprep.subr.mxu0 0.0
        %1617 = vmatpush1.msra.mxu0 0.0
        %1618 = vmatprep.subr.mxu0 0.0
        %1619 = vmatpush1.msra.mxu0 0.0
        %1620 = vmatprep.subr.mxu0 0.0
        %1621 = vmatpush1.msra.mxu0 0.0
        %1622 = vmatprep.subr.mxu0 0.0
        %1623 = vmatpush1.msra.mxu0 0.0
        %1624 = vmatprep.subr.mxu0 0.0
        %1625 = vmatpush1.msra.mxu0 0.0
        %1626 = vmatprep.subr.mxu0 0.0
        %1627 = vmatpush1.msra.mxu0 0.0
        %1628 = vmatprep.subr.mxu0 0.0
        %1629 = vmatpush1.msra.mxu0 0.0
        %1630 = vmatprep.subr.mxu0 0.0
        %1631 = vmatpush1.msra.mxu0 0.0
        %1632 = vmatprep.subr.mxu0 0.0
        %1633 = vmatpush1.msra.mxu0 0.0
        %1634 = vmatprep.subr.mxu0 0.0
        %1635 = vmatpush1.msra.mxu0 0.0
        %1636 = vmatprep.subr.mxu0 0.0
        %1637 = vmatpush1.msra.mxu0 0.0
        %1638 = vmatprep.subr.mxu0 0.0
        %1639 = vmatpush1.msra.mxu0 0.0
        %1640 = vmatprep.subr.mxu0 0.0
        %1641 = vmatpush1.msra.mxu0 0.0
        %1642 = vmatprep.subr.mxu0 0.0
        %1643 = vmatpush1.msra.mxu0 0.0
        %1644 = vmatprep.subr.mxu0 0.0
        %1645 = vmatpush1.msra.mxu0 0.0
        %1646 = vmatprep.subr.mxu0 0.0
        %1647 = vmatpush1.msra.mxu0 0.0
        %1648 = vmatprep.subr.mxu0 0.0
        %1649 = vmatpush1.msra.mxu0 0.0
        %1650 = vmatprep.subr.mxu0 0.0
        %1651 = vmatpush1.msra.mxu0 0.0
        %1652 = vmatprep.subr.mxu0 0.0
        %1653 = vmatpush1.msra.mxu0 0.0
        %1654 = vmatprep.subr.mxu0 0.0
        %1655 = vmatpush1.msra.mxu0 0.0
        %1656 = vmatprep.subr.mxu0 0.0
        %1657 = vmatpush1.msra.mxu0 0.0
        %1658 = vmatprep.subr.mxu0 0.0
        %1659 = vmatpush1.msra.mxu0 0.0
        %1660 = vmatprep.mubr.f32.mxu0 0.0
        %1661 = vmatmul.mubr.f32.gmra.mrb[0].mxu0 %v1594
        %v1662 = vpop.f32.mrb[0].mxu0
        %v1663 = vadd.f32 0.0, %v1662
        %v1664 = vpop.f32.mrb[0].mxu0
        %v1665 = vadd.f32 0.0, %v1664
        %1666 = vdwg.mxu0
        %v1667 = vadd.f32 %v1585, %v1663
        %v1668 = vadd.f32 %v1586, %v1665
        %1669 = vrot.lane.b32.xlu0 %v1235, 127
        %v1670 = vpop.permute.xlu0 %1669
        %1671 = vrot.lane.b32.xlu0 %v1236, 127
        %v1672 = vpop.permute.xlu0 %1671
        %v1673 = vsel %vm823, %v1670, %v1672
        %v1674 = vsel %vm823, %v1672, %v1670
        %v1675 = vmul.f32 %v1673, %v830
        %v1676 = vmul.f32 %v1674, %v834
        %s1677 = scalar_lea.vmem %s3, 40
        %v1678 = vld [vmem:[%s1677] sm:$0xff]
        %v1680 = vsel %vm1252, %v1678, 0
        %1682 = vmatprep.subr.mxu0 %v1676
        %1683 = vmatpush1.msra.mxu0 %v1675
        %1684 = vmatprep.subr.mxu0 0.0
        %1685 = vmatpush1.msra.mxu0 0.0
        %1686 = vmatprep.subr.mxu0 0.0
        %1687 = vmatpush1.msra.mxu0 0.0
        %1688 = vmatprep.subr.mxu0 0.0
        %1689 = vmatpush1.msra.mxu0 0.0
        %1690 = vmatprep.subr.mxu0 0.0
        %1691 = vmatpush1.msra.mxu0 0.0
        %1692 = vmatprep.subr.mxu0 0.0
        %1693 = vmatpush1.msra.mxu0 0.0
        %1694 = vmatprep.subr.mxu0 0.0
        %1695 = vmatpush1.msra.mxu0 0.0
        %1696 = vmatprep.subr.mxu0 0.0
        %1697 = vmatpush1.msra.mxu0 0.0
        %1698 = vmatprep.subr.mxu0 0.0
        %1699 = vmatpush1.msra.mxu0 0.0
        %1700 = vmatprep.subr.mxu0 0.0
        %1701 = vmatpush1.msra.mxu0 0.0
        %1702 = vmatprep.subr.mxu0 0.0
        %1703 = vmatpush1.msra.mxu0 0.0
        %1704 = vmatprep.subr.mxu0 0.0
        %1705 = vmatpush1.msra.mxu0 0.0
        %1706 = vmatprep.subr.mxu0 0.0
        %1707 = vmatpush1.msra.mxu0 0.0
        %1708 = vmatprep.subr.mxu0 0.0
        %1709 = vmatpush1.msra.mxu0 0.0
        %1710 = vmatprep.subr.mxu0 0.0
        %1711 = vmatpush1.msra.mxu0 0.0
        %1712 = vmatprep.subr.mxu0 0.0
        %1713 = vmatpush1.msra.mxu0 0.0
        %1714 = vmatprep.subr.mxu0 0.0
        %1715 = vmatpush1.msra.mxu0 0.0
        %1716 = vmatprep.subr.mxu0 0.0
        %1717 = vmatpush1.msra.mxu0 0.0
        %1718 = vmatprep.subr.mxu0 0.0
        %1719 = vmatpush1.msra.mxu0 0.0
        %1720 = vmatprep.subr.mxu0 0.0
        %1721 = vmatpush1.msra.mxu0 0.0
        %1722 = vmatprep.subr.mxu0 0.0
        %1723 = vmatpush1.msra.mxu0 0.0
        %1724 = vmatprep.subr.mxu0 0.0
        %1725 = vmatpush1.msra.mxu0 0.0
        %1726 = vmatprep.subr.mxu0 0.0
        %1727 = vmatpush1.msra.mxu0 0.0
        %1728 = vmatprep.subr.mxu0 0.0
        %1729 = vmatpush1.msra.mxu0 0.0
        %1730 = vmatprep.subr.mxu0 0.0
        %1731 = vmatpush1.msra.mxu0 0.0
        %1732 = vmatprep.subr.mxu0 0.0
        %1733 = vmatpush1.msra.mxu0 0.0
        %1734 = vmatprep.subr.mxu0 0.0
        %1735 = vmatpush1.msra.mxu0 0.0
        %1736 = vmatprep.subr.mxu0 0.0
        %1737 = vmatpush1.msra.mxu0 0.0
        %1738 = vmatprep.subr.mxu0 0.0
        %1739 = vmatpush1.msra.mxu0 0.0
        %1740 = vmatprep.subr.mxu0 0.0
        %1741 = vmatpush1.msra.mxu0 0.0
        %1742 = vmatprep.subr.mxu0 0.0
        %1743 = vmatpush1.msra.mxu0 0.0
        %1744 = vmatprep.subr.mxu0 0.0
        %1745 = vmatpush1.msra.mxu0 0.0
        %1746 = vmatprep.mubr.f32.mxu0 0.0
        %1747 = vmatmul.mubr.f32.gmra.mrb[0].mxu0 %v1680
        %v1748 = vpop.f32.mrb[0].mxu0
        %v1749 = vadd.f32 0.0, %v1748
        %v1750 = vpop.f32.mrb[0].mxu0
        %v1751 = vadd.f32 0.0, %v1750
        %1752 = vdwg.mxu0
        %v1753 = vadd.f32 %v1667, %v1749
        %v1754 = vadd.f32 %v1668, %v1751
        %1755 = vrot.lane.b32.xlu0 %v1235, 113
        %v1756 = vpop.permute.xlu0 %1755
        %1757 = vrot.lane.b32.xlu0 %v1236, 113
        %v1758 = vpop.permute.xlu0 %1757
        %v1759 = vsel %vm927, %v1756, %v1758
        %v1760 = vsel %vm927, %v1758, %v1756
        %v1761 = vmul.f32 %v1759, %v934
        %v1762 = vmul.f32 %v1760, %v938
        %s1763 = scalar_lea.vmem %s3, 48
        %v1764 = vld [vmem:[%s1763] sm:$0xff]
        %v1766 = vsel %vm1252, %v1764, 0
        %1768 = vmatprep.subr.mxu0 %v1762
        %1769 = vmatpush1.msra.mxu0 %v1761
        %1770 = vmatprep.subr.mxu0 0.0
        %1771 = vmatpush1.msra.mxu0 0.0
        %1772 = vmatprep.subr.mxu0 0.0
        %1773 = vmatpush1.msra.mxu0 0.0
        %1774 = vmatprep.subr.mxu0 0.0
        %1775 = vmatpush1.msra.mxu0 0.0
        %1776 = vmatprep.subr.mxu0 0.0
        %1777 = vmatpush1.msra.mxu0 0.0
        %1778 = vmatprep.subr.mxu0 0.0
        %1779 = vmatpush1.msra.mxu0 0.0
        %1780 = vmatprep.subr.mxu0 0.0
        %1781 = vmatpush1.msra.mxu0 0.0
        %1782 = vmatprep.subr.mxu0 0.0
        %1783 = vmatpush1.msra.mxu0 0.0
        %1784 = vmatprep.subr.mxu0 0.0
        %1785 = vmatpush1.msra.mxu0 0.0
        %1786 = vmatprep.subr.mxu0 0.0
        %1787 = vmatpush1.msra.mxu0 0.0
        %1788 = vmatprep.subr.mxu0 0.0
        %1789 = vmatpush1.msra.mxu0 0.0
        %1790 = vmatprep.subr.mxu0 0.0
        %1791 = vmatpush1.msra.mxu0 0.0
        %1792 = vmatprep.subr.mxu0 0.0
        %1793 = vmatpush1.msra.mxu0 0.0
        %1794 = vmatprep.subr.mxu0 0.0
        %1795 = vmatpush1.msra.mxu0 0.0
        %1796 = vmatprep.subr.mxu0 0.0
        %1797 = vmatpush1.msra.mxu0 0.0
        %1798 = vmatprep.subr.mxu0 0.0
        %1799 = vmatpush1.msra.mxu0 0.0
        %1800 = vmatprep.subr.mxu0 0.0
        %1801 = vmatpush1.msra.mxu0 0.0
        %1802 = vmatprep.subr.mxu0 0.0
        %1803 = vmatpush1.msra.mxu0 0.0
        %1804 = vmatprep.subr.mxu0 0.0
        %1805 = vmatpush1.msra.mxu0 0.0
        %1806 = vmatprep.subr.mxu0 0.0
        %1807 = vmatpush1.msra.mxu0 0.0
        %1808 = vmatprep.subr.mxu0 0.0
        %1809 = vmatpush1.msra.mxu0 0.0
        %1810 = vmatprep.subr.mxu0 0.0
        %1811 = vmatpush1.msra.mxu0 0.0
        %1812 = vmatprep.subr.mxu0 0.0
        %1813 = vmatpush1.msra.mxu0 0.0
        %1814 = vmatprep.subr.mxu0 0.0
        %1815 = vmatpush1.msra.mxu0 0.0
        %1816 = vmatprep.subr.mxu0 0.0
        %1817 = vmatpush1.msra.mxu0 0.0
        %1818 = vmatprep.subr.mxu0 0.0
        %1819 = vmatpush1.msra.mxu0 0.0
        %1820 = vmatprep.subr.mxu0 0.0
        %1821 = vmatpush1.msra.mxu0 0.0
        %1822 = vmatprep.subr.mxu0 0.0
        %1823 = vmatpush1.msra.mxu0 0.0
        %1824 = vmatprep.subr.mxu0 0.0
        %1825 = vmatpush1.msra.mxu0 0.0
        %1826 = vmatprep.subr.mxu0 0.0
        %1827 = vmatpush1.msra.mxu0 0.0
        %1828 = vmatprep.subr.mxu0 0.0
        %1829 = vmatpush1.msra.mxu0 0.0
        %1830 = vmatprep.subr.mxu0 0.0
        %1831 = vmatpush1.msra.mxu0 0.0
        %1832 = vmatprep.mubr.f32.mxu0 0.0
        %1833 = vmatmul.mubr.f32.gmra.mrb[0].mxu0 %v1766
        %v1834 = vpop.f32.mrb[0].mxu0
        %v1835 = vadd.f32 0.0, %v1834
        %v1836 = vpop.f32.mrb[0].mxu0
        %v1837 = vadd.f32 0.0, %v1836
        %1838 = vdwg.mxu0
        %v1839 = vadd.f32 %v1753, %v1835
        %v1840 = vadd.f32 %v1754, %v1837
        %1841 = vrot.lane.b32.xlu0 %v1235, 112
        %v1842 = vpop.permute.xlu0 %1841
        %1843 = vrot.lane.b32.xlu0 %v1236, 112
        %v1844 = vpop.permute.xlu0 %1843
        %v1845 = vsel %vm1031, %v1842, %v1844
        %v1846 = vsel %vm1031, %v1844, %v1842
        %v1847 = vmul.f32 %v1845, %v1038
        %v1848 = vmul.f32 %v1846, %v1042
        %s1849 = scalar_lea.vmem %s3, 56
        %v1850 = vld [vmem:[%s1849] sm:$0xff]
        %v1852 = vsel %vm1252, %v1850, 0
        %1854 = vmatprep.subr.mxu0 %v1848
        %1855 = vmatpush1.msra.mxu0 %v1847
        %1856 = vmatprep.subr.mxu0 0.0
        %1857 = vmatpush1.msra.mxu0 0.0
        %1858 = vmatprep.subr.mxu0 0.0
        %1859 = vmatpush1.msra.mxu0 0.0
        %1860 = vmatprep.subr.mxu0 0.0
        %1861 = vmatpush1.msra.mxu0 0.0
        %1862 = vmatprep.subr.mxu0 0.0
        %1863 = vmatpush1.msra.mxu0 0.0
        %1864 = vmatprep.subr.mxu0 0.0
        %1865 = vmatpush1.msra.mxu0 0.0
        %1866 = vmatprep.subr.mxu0 0.0
        %1867 = vmatpush1.msra.mxu0 0.0
        %1868 = vmatprep.subr.mxu0 0.0
        %1869 = vmatpush1.msra.mxu0 0.0
        %1870 = vmatprep.subr.mxu0 0.0
        %1871 = vmatpush1.msra.mxu0 0.0
        %1872 = vmatprep.subr.mxu0 0.0
        %1873 = vmatpush1.msra.mxu0 0.0
        %1874 = vmatprep.subr.mxu0 0.0
        %1875 = vmatpush1.msra.mxu0 0.0
        %1876 = vmatprep.subr.mxu0 0.0
        %1877 = vmatpush1.msra.mxu0 0.0
        %1878 = vmatprep.subr.mxu0 0.0
        %1879 = vmatpush1.msra.mxu0 0.0
        %1880 = vmatprep.subr.mxu0 0.0
        %1881 = vmatpush1.msra.mxu0 0.0
        %1882 = vmatprep.subr.mxu0 0.0
        %1883 = vmatpush1.msra.mxu0 0.0
        %1884 = vmatprep.subr.mxu0 0.0
        %1885 = vmatpush1.msra.mxu0 0.0
        %1886 = vmatprep.subr.mxu0 0.0
        %1887 = vmatpush1.msra.mxu0 0.0
        %1888 = vmatprep.subr.mxu0 0.0
        %1889 = vmatpush1.msra.mxu0 0.0
        %1890 = vmatprep.subr.mxu0 0.0
        %1891 = vmatpush1.msra.mxu0 0.0
        %1892 = vmatprep.subr.mxu0 0.0
        %1893 = vmatpush1.msra.mxu0 0.0
        %1894 = vmatprep.subr.mxu0 0.0
        %1895 = vmatpush1.msra.mxu0 0.0
        %1896 = vmatprep.subr.mxu0 0.0
        %1897 = vmatpush1.msra.mxu0 0.0
        %1898 = vmatprep.subr.mxu0 0.0
        %1899 = vmatpush1.msra.mxu0 0.0
        %1900 = vmatprep.subr.mxu0 0.0
        %1901 = vmatpush1.msra.mxu0 0.0
        %1902 = vmatprep.subr.mxu0 0.0
        %1903 = vmatpush1.msra.mxu0 0.0
        %1904 = vmatprep.subr.mxu0 0.0
        %1905 = vmatpush1.msra.mxu0 0.0
        %1906 = vmatprep.subr.mxu0 0.0
        %1907 = vmatpush1.msra.mxu0 0.0
        %1908 = vmatprep.subr.mxu0 0.0
        %1909 = vmatpush1.msra.mxu0 0.0
        %1910 = vmatprep.subr.mxu0 0.0
        %1911 = vmatpush1.msra.mxu0 0.0
        %1912 = vmatprep.subr.mxu0 0.0
        %1913 = vmatpush1.msra.mxu0 0.0
        %1914 = vmatprep.subr.mxu0 0.0
        %1915 = vmatpush1.msra.mxu0 0.0
        %1916 = vmatprep.subr.mxu0 0.0
        %1917 = vmatpush1.msra.mxu0 0.0
        %1918 = vmatprep.mubr.f32.mxu0 0.0
        %1919 = vmatmul.mubr.f32.gmra.mrb[0].mxu0 %v1852
        %v1920 = vpop.f32.mrb[0].mxu0
        %v1921 = vadd.f32 0.0, %v1920
        %v1922 = vpop.f32.mrb[0].mxu0
        %v1923 = vadd.f32 0.0, %v1922
        %1924 = vdwg.mxu0
        %v1925 = vadd.f32 %v1839, %v1921
        %v1926 = vadd.f32 %v1840, %v1923
        %1927 = vrot.lane.b32.xlu0 %v1235, 111
        %v1928 = vpop.permute.xlu0 %1927
        %1929 = vrot.lane.b32.xlu0 %v1236, 111
        %v1930 = vpop.permute.xlu0 %1929
        %v1931 = vsel %vm1135, %v1928, %v1930
        %v1932 = vsel %vm1135, %v1930, %v1928
        %v1933 = vmul.f32 %v1931, %v1142
        %v1934 = vmul.f32 %v1932, %v1146
        %s1935 = scalar_lea.vmem %s3, 64
        %v1936 = vld [vmem:[%s1935] sm:$0xff]
        %v1938 = vsel %vm1252, %v1936, 0
        %1940 = vmatprep.subr.mxu0 %v1934
        %1941 = vmatpush1.msra.mxu0 %v1933
        %1942 = vmatprep.subr.mxu0 0.0
        %1943 = vmatpush1.msra.mxu0 0.0
        %1944 = vmatprep.subr.mxu0 0.0
        %1945 = vmatpush1.msra.mxu0 0.0
        %1946 = vmatprep.subr.mxu0 0.0
        %1947 = vmatpush1.msra.mxu0 0.0
        %1948 = vmatprep.subr.mxu0 0.0
        %1949 = vmatpush1.msra.mxu0 0.0
        %1950 = vmatprep.subr.mxu0 0.0
        %1951 = vmatpush1.msra.mxu0 0.0
        %1952 = vmatprep.subr.mxu0 0.0
        %1953 = vmatpush1.msra.mxu0 0.0
        %1954 = vmatprep.subr.mxu0 0.0
        %1955 = vmatpush1.msra.mxu0 0.0
        %1956 = vmatprep.subr.mxu0 0.0
        %1957 = vmatpush1.msra.mxu0 0.0
        %1958 = vmatprep.subr.mxu0 0.0
        %1959 = vmatpush1.msra.mxu0 0.0
        %1960 = vmatprep.subr.mxu0 0.0
        %1961 = vmatpush1.msra.mxu0 0.0
        %1962 = vmatprep.subr.mxu0 0.0
        %1963 = vmatpush1.msra.mxu0 0.0
        %1964 = vmatprep.subr.mxu0 0.0
        %1965 = vmatpush1.msra.mxu0 0.0
        %1966 = vmatprep.subr.mxu0 0.0
        %1967 = vmatpush1.msra.mxu0 0.0
        %1968 = vmatprep.subr.mxu0 0.0
        %1969 = vmatpush1.msra.mxu0 0.0
        %1970 = vmatprep.subr.mxu0 0.0
        %1971 = vmatpush1.msra.mxu0 0.0
        %1972 = vmatprep.subr.mxu0 0.0
        %1973 = vmatpush1.msra.mxu0 0.0
        %1974 = vmatprep.subr.mxu0 0.0
        %1975 = vmatpush1.msra.mxu0 0.0
        %1976 = vmatprep.subr.mxu0 0.0
        %1977 = vmatpush1.msra.mxu0 0.0
        %1978 = vmatprep.subr.mxu0 0.0
        %1979 = vmatpush1.msra.mxu0 0.0
        %1980 = vmatprep.subr.mxu0 0.0
        %1981 = vmatpush1.msra.mxu0 0.0
        %1982 = vmatprep.subr.mxu0 0.0
        %1983 = vmatpush1.msra.mxu0 0.0
        %1984 = vmatprep.subr.mxu0 0.0
        %1985 = vmatpush1.msra.mxu0 0.0
        %1986 = vmatprep.subr.mxu0 0.0
        %1987 = vmatpush1.msra.mxu0 0.0
        %1988 = vmatprep.subr.mxu0 0.0
        %1989 = vmatpush1.msra.mxu0 0.0
        %1990 = vmatprep.subr.mxu0 0.0
        %1991 = vmatpush1.msra.mxu0 0.0
        %1992 = vmatprep.subr.mxu0 0.0
        %1993 = vmatpush1.msra.mxu0 0.0
        %1994 = vmatprep.subr.mxu0 0.0
        %1995 = vmatpush1.msra.mxu0 0.0
        %1996 = vmatprep.subr.mxu0 0.0
        %1997 = vmatpush1.msra.mxu0 0.0
        %1998 = vmatprep.subr.mxu0 0.0
        %1999 = vmatpush1.msra.mxu0 0.0
        %2000 = vmatprep.subr.mxu0 0.0
        %2001 = vmatpush1.msra.mxu0 0.0
        %2002 = vmatprep.subr.mxu0 0.0
        %2003 = vmatpush1.msra.mxu0 0.0
        %2004 = vmatprep.mubr.f32.mxu0 0.0
        %2005 = vmatmul.mubr.f32.gmra.mrb[0].mxu0 %v1938
        %v2006 = vpop.f32.mrb[0].mxu0
        %v2007 = vadd.f32 0.0, %v2006
        %v2008 = vpop.f32.mrb[0].mxu0
        %v2009 = vadd.f32 0.0, %v2008
        %2010 = vdwg.mxu0
        %v2011 = vadd.f32 %v1925, %v2007
        %v2012 = vadd.f32 %v1926, %v2009
        %v2013 = vld [vmem:[%s6] sm:$0xff]
        %v2015 = vsel %vm327, %v2013, 0
        %v2017 = vsel %vm331, %v277, 0
        %v2019 = vsel %vm331, %v302, 0
        %2021 = vmatprep.subr.mxu0 %v2019
        %2022 = vmatpush1.msra.mxu0 %v2017
        %2023 = vmatprep.subr.mxu0 0.0
        %2024 = vmatpush1.msra.mxu0 0.0
        %2025 = vmatprep.subr.mxu0 0.0
        %2026 = vmatpush1.msra.mxu0 0.0
        %2027 = vmatprep.subr.mxu0 0.0
        %2028 = vmatpush1.msra.mxu0 0.0
        %2029 = vmatprep.subr.mxu0 0.0
        %2030 = vmatpush1.msra.mxu0 0.0
        %2031 = vmatprep.subr.mxu0 0.0
        %2032 = vmatpush1.msra.mxu0 0.0
        %2033 = vmatprep.subr.mxu0 0.0
        %2034 = vmatpush1.msra.mxu0 0.0
        %2035 = vmatprep.subr.mxu0 0.0
        %2036 = vmatpush1.msra.mxu0 0.0
        %2037 = vmatprep.subr.mxu0 0.0
        %2038 = vmatpush1.msra.mxu0 0.0
        %2039 = vmatprep.subr.mxu0 0.0
        %2040 = vmatpush1.msra.mxu0 0.0
        %2041 = vmatprep.subr.mxu0 0.0
        %2042 = vmatpush1.msra.mxu0 0.0
        %2043 = vmatprep.subr.mxu0 0.0
        %2044 = vmatpush1.msra.mxu0 0.0
        %2045 = vmatprep.subr.mxu0 0.0
        %2046 = vmatpush1.msra.mxu0 0.0
        %2047 = vmatprep.subr.mxu0 0.0
        %2048 = vmatpush1.msra.mxu0 0.0
        %2049 = vmatprep.subr.mxu0 0.0
        %2050 = vmatpush1.msra.mxu0 0.0
        %2051 = vmatprep.subr.mxu0 0.0
        %2052 = vmatpush1.msra.mxu0 0.0
        %2053 = vmatprep.subr.mxu0 0.0
        %2054 = vmatpush1.msra.mxu0 0.0
        %2055 = vmatprep.subr.mxu0 0.0
        %2056 = vmatpush1.msra.mxu0 0.0
        %2057 = vmatprep.subr.mxu0 0.0
        %2058 = vmatpush1.msra.mxu0 0.0
        %2059 = vmatprep.subr.mxu0 0.0
        %2060 = vmatpush1.msra.mxu0 0.0
        %2061 = vmatprep.subr.mxu0 0.0
        %2062 = vmatpush1.msra.mxu0 0.0
        %2063 = vmatprep.subr.mxu0 0.0
        %2064 = vmatpush1.msra.mxu0 0.0
        %2065 = vmatprep.subr.mxu0 0.0
        %2066 = vmatpush1.msra.mxu0 0.0
        %2067 = vmatprep.subr.mxu0 0.0
        %2068 = vmatpush1.msra.mxu0 0.0
        %2069 = vmatprep.subr.mxu0 0.0
        %2070 = vmatpush1.msra.mxu0 0.0
        %2071 = vmatprep.subr.mxu0 0.0
        %2072 = vmatpush1.msra.mxu0 0.0
        %2073 = vmatprep.subr.mxu0 0.0
        %2074 = vmatpush1.msra.mxu0 0.0
        %2075 = vmatprep.subr.mxu0 0.0
        %2076 = vmatpush1.msra.mxu0 0.0
        %2077 = vmatprep.subr.mxu0 0.0
        %2078 = vmatpush1.msra.mxu0 0.0
        %2079 = vmatprep.subr.mxu0 0.0
        %2080 = vmatpush1.msra.mxu0 0.0
        %2081 = vmatprep.subr.mxu0 0.0
        %2082 = vmatpush1.msra.mxu0 0.0
        %2083 = vmatprep.subr.mxu0 0.0
        %2084 = vmatpush1.msra.mxu0 0.0
        %2085 = vmatprep.mubr.f32.mxu0 0.0
        %2086 = vmatmul.mubr.f32.gmra.mrb[0].mxu0 %v2015
        %v2087 = vpop.f32.mrb[0].mxu0
        %v2088 = vadd.f32 0.0, %v2087
        %v2089 = vpop.f32.mrb[0].mxu0
        %v2090 = vadd.f32 0.0, %v2089
        %2091 = vdwg.mxu0
        %v2092 = vadd.f32 %v2011, %v2088
        %v2093 = vadd.f32 %v2012, %v2090
        %v2094 = vmax.f32 %v2092, 0.0
        %v2095 = vmax.f32 %v2093, 0.0
        %2096 = vst [vmem:[%s271] sm:$0xff] %v2094
        %2097 = vst [vmem:[%s271 + $0x8] sm:$0xff] %v2095
        %s2098 = sand.u32 %s181, 1
        %s2099 = scalar_lea.sflag [#allocation3], %s2098
        %s2100 = sand.u32 %s181, 1
        %s2101 = smul.addr %s2100, 16
        %s2102 = scalar_lea.vmem [#allocation2], %s2101
        // Predicated region
        $region49: #{tpu_custom_call.1} parent=47 // pred_check
          %p2103 = pneg %p191
        $region50: #{tpu_custom_call.1} parent=47 // pred_check_branch
          %2105 = sbr.rel (%p2103) target = $region52
        $region51: #{tpu_custom_call.1} parent=47 // pred_region
          %s2107 = ssub.s32 256, 256
          %2108 = vsyncadd %s2099, %s2107
          %s2109 = smul.addr %s21, 2
          %s2110 = smul.addr %s2109, 128
          %s2111 = scalar_lea.hbm %s7, %s2110
          %s2113 = sshll.u32 %s2102, 4
          %s2114 = int_to_ptr.vmem [resolvable:$true] %s2113
          %2116 = dma.vmem_to_hbm [thread:$0]  %s2114, 256, %s2111, %s2099
        $region52: #{tpu_custom_call.1} parent=47 // pred_fallthru
          _
      $region48: #{tpu_custom_call.1} parent=5 // pred_fallthru
        _
      %p2117 = scmp.le.s32.totalorder 2, %s16
      // Predicated region
      $region53: #{tpu_custom_call.1} parent=5 // pred_check
        %p2118 = pneg %p2117
      $region54: #{tpu_custom_call.1} parent=5 // pred_check_branch
        %2120 = sbr.rel (%p2118) target = $region56
      $region55: #{tpu_custom_call.1} parent=5 // pred_region
        %s2121 = ssub.s32 %s16, 2
        // Predicated region
        $region57: #{tpu_custom_call.1} parent=55 // pred_check
          %p2122 = pneg %p197
        $region58: #{tpu_custom_call.1} parent=55 // pred_check_branch
          %2124 = sbr.rel (%p2122) target = $region60
        $region59: #{tpu_custom_call.1} parent=55 // pred_region
          %s2125 = sand.u32 %s182, 1
          %s2126 = scalar_lea.sflag [#allocation3], %s2125
          %s2127 = sand.u32 %s182, 1
          %s2128 = smul.addr %s2127, 16
          %s2129 = scalar_lea.vmem [#allocation2], %s2128
          %2130 = dma.done %s2126, 256
        $region60: #{tpu_custom_call.1} parent=55 // pred_fallthru
          _
      $region56: #{tpu_custom_call.1} parent=5 // pred_fallthru
        _
    $region6: #{tpu_custom_call.1} parent=1 // loop_footer
      %s20 = sadd.s32 1, %s16
    $region7: #{tpu_custom_call.1} parent=1 // loop_footer_branch
      %15 = sbr.rel target = $region3
    $region8: #{tpu_custom_call.1} parent=1 // loop_exit
      _
    %2131 = vsyncpa [#allocation3], 1
    %s2132 = scalar_lea.sflag [#allocation3], 1
    %2133 = vsyncpa %s2132, 1

</llo_original>
